<compile_context>
chip_gen: v7x
topology: tpu7x:2x2x1
jax: 0.10.0
libtpu: 0.0.40
codegen_flags: <defaults>
</compile_context>

<pallas_src>
import functools

import jax
import jax.numpy as jnp
from jax.experimental import pallas as pl
from jax.experimental.pallas import tpu as pltpu


# ---------------------------------------------------------------------------
# Pallas kernel: one grid step == one GIN-LSPE layer.
#   hp0_ref : (N, 2H) f32   embedded [h|p], only read at l == 0
#   adj_ref : (N, N)  bf16  dense adjacency, VMEM-resident across layers
#   w_ref   : (5H, H) bf16  packed per-layer weights [hW1; hW2; pW1; pW2]
#   b_ref   : (4, H)  f32   packed per-layer biases  [hb1; hb2; pb1; pb2]
#   hp_ref  : (N, 2H) f32   OUTPUT block, resident across layers (the state)
# ---------------------------------------------------------------------------
def gin_lspe_kernel(hp0_ref, adj_ref, w_ref, b_ref, hp_ref, *, hidden):
    f32, bf16 = jnp.float32, jnp.bfloat16
    H = hidden
    l = pl.program_id(0)

    # first layer: initialize the resident state from the embedded inputs
    @pl.when(l == 0)
    def _():
        hp_ref[...] = hp0_ref[...]

    def mm(a_bf16, w_bf16):  # bf16 x bf16 -> f32 accumulate on the MXU
        return jnp.dot(a_bf16, w_bf16, preferred_element_type=f32)

    A = adj_ref[...]                        # (N, N)  bf16
    hp = hp_ref[...]                        # (N, 2H) f32

    # fused neighbor aggregation: ONE 2H-wide matmul A @ [h|p]
    agg = mm(A, hp.astype(bf16))            # (N, 2H) f32
    x = (hp + agg).astype(bf16)             # cat(h,p) + A@cat(h,p)
    xp = x[:, H:]                           # p + A@p  (128-lane-aligned slice)

    # packed per-layer weights / biases (static, tile-aligned slices)
    hW1 = w_ref[0:2 * H, :]                 # (2H, H)
    hW2 = w_ref[2 * H:3 * H, :]             # (H, H)
    pW1 = w_ref[3 * H:4 * H, :]             # (H, H)
    pW2 = w_ref[4 * H:5 * H, :]             # (H, H)
    hb1 = b_ref[0:1, :]
    hb2 = b_ref[1:2, :]
    pb1 = b_ref[2:3, :]
    pb2 = b_ref[3:4, :]

    # h_update: Linear(2H->H) -> ReLU -> Linear(H->H)   (K=2H fused matmul)
    th = jnp.maximum(mm(x, hW1) + hb1, 0.0)
    new_h = mm(th.astype(bf16), hW2) + hb2

    # p_update: Linear(H->H) -> ReLU -> Linear(H->H)
    tp = jnp.maximum(mm(xp, pW1) + pb1, 0.0)
    new_p = mm(tp.astype(bf16), pW2) + pb2

    # outer residual + ReLU (GINLSPE.forward loop), stores at the 128 boundary
    hp_ref[:, 0:H] = hp[:, 0:H] + jnp.maximum(new_h, 0.0)
    hp_ref[:, H:2 * H] = hp[:, H:2 * H] + jnp.maximum(new_p, 0.0)


# ---------------------------------------------------------------------------
# Wrapper: XLA glue (embeddings, adjacency/pool construction, pooling, readout)
# + the layer-loop pallas_call with packed per-layer weight streaming.
# ---------------------------------------------------------------------------
@functools.partial(jax.jit, static_argnames=("num_graphs",))
def gin_lspe_forward(h0, p0, edge_index, batch, params, num_graphs):
    f32, bf16 = jnp.float32, jnp.bfloat16
    n = h0.shape[0]
    hdim = params["he_w"].shape[1]
    num_layers = params["hW1"].shape[0]
    send, rec = edge_index[0], edge_index[1]

    # pad node count to a lane-friendly multiple of 128 (zero rows/cols: exact)
    npad = ((n + 127) // 128) * 128

    # ---- XLA glue: input embeddings (f32), fused [h|p] state ----
    h = h0.astype(f32) @ params["he_w"] + params["he_b"]
    p = p0.astype(f32) @ params["pe_w"] + params["pe_b"]
    hp0 = jnp.concatenate([h, p], axis=1)                 # (n, 2H)
    hp0 = jnp.pad(hp0, ((0, npad - n), (0, 0)))           # (npad, 2H)

    # adjacency: A[r, s] = #edges (send=s, rec=r)  ->  scatter_add == A @ x
    adj = jnp.zeros((npad, npad), f32).at[rec, send].add(1.0).astype(bf16)

    # packed per-layer operands: one bf16 weight slab + one f32 bias slab
    w_packed = jnp.concatenate(
        [params["hW1"], params["hW2"], params["pW1"], params["pW2"]],
        axis=1).astype(bf16)                              # (L, 5H, H)
    b_packed = jnp.concatenate(
        [params["hb1"], params["hb2"], params["pb1"], params["pb2"]],
        axis=1).astype(f32)                               # (L, 4, H)

    grid_spec = pltpu.PrefetchScalarGridSpec(
        num_scalar_prefetch=0,
        grid=(num_layers,),
        in_specs=[
            pl.BlockSpec((npad, 2 * hdim), lambda l: (0, 0)),           # hp0
            pl.BlockSpec((npad, npad), lambda l: (0, 0)),               # adj
            pl.BlockSpec((None, 5 * hdim, hdim), lambda l: (l, 0, 0)),  # weights
            pl.BlockSpec((None, 4, hdim), lambda l: (l, 0, 0)),         # biases
        ],
        out_specs=pl.BlockSpec((npad, 2 * hdim), lambda l: (0, 0)),
    )

    hp_out = pl.pallas_call(
        functools.partial(gin_lspe_kernel, hidden=hdim),
        out_shape=jax.ShapeDtypeStruct((npad, 2 * hdim), f32),
        grid_spec=grid_spec,
        compiler_params=pltpu.CompilerParams(
            dimension_semantics=("arbitrary",),
            vmem_limit_bytes=48 * 1024 * 1024),
    )(hp0, adj, w_packed, b_packed)

    # ---- XLA glue: global_add_pool + readout MLP ----
    h_f, p_f = hp_out[:n, :hdim], hp_out[:n, hdim:]
    pool = (batch[None, :] == jnp.arange(num_graphs)[:, None]).astype(f32)
    z = jnp.concatenate([pool @ h_f, pool @ p_f], axis=1)
    out = (jnp.maximum(z @ params["rW1"] + params["rb1"], 0.0)
           @ params["rW2"] + params["rb2"])
    return out[:, 0]  # .squeeze()


# ---------------------------------------------------------------------------
# Deterministic parameter init (Linear weights stored as (in, out))
# ---------------------------------------------------------------------------
def init_params(key, feat_in, pos_in, hidden, num_layers):
    keys = iter(jax.random.split(key, 8 * num_layers + 16))

    def lin(kin, kout):
        w = jax.random.normal(next(keys), (kin, kout), jnp.float32) * 0.1
        b = jax.random.normal(next(keys), (1, kout), jnp.float32) * 0.1
        return w, b

    he_w, he_b = lin(feat_in, hidden)
    pe_w, pe_b = lin(pos_in, hidden)

    hW1, hb1, hW2, hb2 = [], [], [], []
    pW1, pb1, pW2, pb2 = [], [], [], []
    for _ in range(num_layers):
        w, b = lin(2 * hidden, hidden); hW1.append(w); hb1.append(b)
        w, b = lin(hidden, hidden);     hW2.append(w); hb2.append(b)
        w, b = lin(hidden, hidden);     pW1.append(w); pb1.append(b)
        w, b = lin(hidden, hidden);     pW2.append(w); pb2.append(b)

    rW1, rb1 = lin(2 * hidden, hidden)
    rW2, rb2 = lin(hidden, 1)

    return dict(
        he_w=he_w, he_b=he_b, pe_w=pe_w, pe_b=pe_b,
        hW1=jnp.stack(hW1), hb1=jnp.stack(hb1),
        hW2=jnp.stack(hW2), hb2=jnp.stack(hb2),
        pW1=jnp.stack(pW1), pb1=jnp.stack(pb1),
        pW2=jnp.stack(pW2), pb2=jnp.stack(pb2),
        rW1=rW1, rb1=rb1, rW2=rW2, rb2=rb2,
    )


# ---------------------------------------------------------------------------
# Pure-JAX f32 reference (mirrors the PyTorch forward semantics exactly)
# ---------------------------------------------------------------------------
def reference_forward(h0, p0, edge_index, batch, params, num_graphs):
    send, rec = edge_index[0], edge_index[1]
    n = h0.shape[0]
    relu = lambda x: jnp.maximum(x, 0.0)

    h = h0 @ params["he_w"] + params["he_b"]
    p = p0 @ params["pe_w"] + params["pe_b"]
    for l in range(params["hW1"].shape[0]):
        hp = jnp.concatenate([h, p], axis=1)
        h_agg = jnp.zeros((n, hp.shape[1]), jnp.float32).at[rec].add(hp[send])
        x = hp + h_agg
        new_h = relu(x @ params["hW1"][l] + params["hb1"][l]) @ params["hW2"][l] + params["hb2"][l]
        p_agg = jnp.zeros((n, p.shape[1]), jnp.float32).at[rec].add(p[send])
        xp = p + p_agg
        new_p = relu(xp @ params["pW1"][l] + params["pb1"][l]) @ params["pW2"][l] + params["pb2"][l]
        h = h + relu(new_h)
        p = p + relu(new_p)
    pool = (batch[None, :] == jnp.arange(num_graphs)[:, None]).astype(jnp.float32)
    z = jnp.concatenate([pool @ h, pool @ p], axis=1)
    return (relu(z @ params["rW1"] + params["rb1"]) @ params["rW2"] + params["rb2"])[:, 0]


# ---------------------------------------------------------------------------
# Mixed-precision reference mirroring the kernel's bf16-in / f32-accumulate math
# (embeddings, pooling and readout are f32 XLA, exactly like the wrapper glue)
# ---------------------------------------------------------------------------
def reference_forward_bf16(h0, p0, edge_index, batch, params, num_graphs):
    bf16, f32 = jnp.bfloat16, jnp.float32
    relu = lambda x: jnp.maximum(x, 0.0)
    mm = lambda a, b: jnp.dot(a.astype(bf16), b.astype(bf16),
                              preferred_element_type=f32)
    send, rec = edge_index[0], edge_index[1]
    n = h0.shape[0]
    hdim = params["he_w"].shape[1]
    adj = jnp.zeros((n, n), f32).at[rec, send].add(1.0)

    h = h0 @ params["he_w"] + params["he_b"]
    p = p0 @ params["pe_w"] + params["pe_b"]
    for l in range(params["hW1"].shape[0]):
        hp = jnp.concatenate([h, p], axis=1)
        x = hp + mm(adj, hp)                      # fused A @ [h|p]
        xp = x[:, hdim:]
        th = relu(mm(x, params["hW1"][l]) + params["hb1"][l])
        new_h = mm(th, params["hW2"][l]) + params["hb2"][l]
        tp = relu(mm(xp, params["pW1"][l]) + params["pb1"][l])
        new_p = mm(tp, params["pW2"][l]) + params["pb2"][l]
        h = h + relu(new_h)
        p = p + relu(new_p)
    pool = (batch[None, :] == jnp.arange(num_graphs)[:, None]).astype(f32)
    z = jnp.concatenate([pool @ h, pool @ p], axis=1)
    return (relu(z @ params["rW1"] + params["rb1"]) @ params["rW2"] + params["rb2"])[:, 0]


if __name__ == "__main__":
    # small synthetic graph batch: 4 graphs, 64 nodes total, 256 directed edges
    N, E, G = 64, 256, 4
    FEAT_IN, POS_IN, HIDDEN, NUM_LAYERS = 8, 4, 128, 3   # lane-dense hidden dim

    key = jax.random.PRNGKey(0)
    k_h, k_p, k_s, k_r, k_w = jax.random.split(key, 5)

    h0 = jax.random.normal(k_h, (N, FEAT_IN), jnp.float32)
    p0 = jax.random.normal(k_p, (N, POS_IN), jnp.float32)
    send = jax.random.randint(k_s, (E,), 0, N, jnp.int32)
    rec = jax.random.randint(k_r, (E,), 0, N, jnp.int32)
    edge_index = jnp.stack([send, rec])                         # (2, E)
    batch = ((jnp.arange(N) * G) // N).astype(jnp.int32)        # (N,)

    params = init_params(k_w, FEAT_IN, POS_IN, HIDDEN, NUM_LAYERS)

    out = gin_lspe_forward(h0, p0, edge_index, batch, params, G)
    out = jax.block_until_ready(out)
    assert out.shape == (G,)

    # tight check vs. a JAX reference with identical mixed-precision math
    ref_mixed = reference_forward_bf16(h0, p0, edge_index, batch, params, G)
    assert jnp.allclose(out, ref_mixed, atol=1e-2, rtol=1e-2), (out, ref_mixed)

    # coarse sanity check vs. the exact f32 (PyTorch-semantics) reference
    ref_f32 = reference_forward(h0, p0, edge_index, batch, params, G)
    assert jnp.allclose(out, ref_f32, atol=2.0, rtol=0.3), (out, ref_f32)

    print("KERNEL_OK")
</pallas_src>

<mosaic_0001>
module attributes {stable_mosaic.version = 11 : i64} {
  func.func private @main(%arg0: i32) attributes {dimension_semantics = [#tpu.dimension_semantics<core_parallel>], iteration_bounds = array<i64: 2>, tpu.core_type = #tpu.core_type<sc_scalar_subcore>, window_params = []} {
    return
  }
}

module attributes {stable_mosaic.version = 11 : i64} {
  func.func private @main(%arg0: i32) attributes {dimension_semantics = [#tpu.dimension_semantics<core_parallel>], iteration_bounds = array<i64: 2>, tpu.core_type = #tpu.core_type<sc_scalar_subcore>, window_params = []} {
    return
  }
}

module attributes {stable_mosaic.version = 11 : i64} {
  func.func @gin_lspe_kernel(%arg0: i32, %arg1: memref<128x256xf32, #tpu.memory_space<vmem>>, %arg2: memref<128x128xbf16, #tpu.memory_space<vmem>>, %arg3: memref<1x640x128xbf16, #tpu.memory_space<vmem>>, %arg4: memref<1x4x128xf32, #tpu.memory_space<vmem>>, %arg5: memref<128x256xf32, #tpu.memory_space<vmem>>) attributes {dimension_semantics = [#tpu.dimension_semantics<arbitrary>], iteration_bounds = array<i64: 3>, scalar_prefetch = 0 : i64, scratch_operands = 0 : i64, tpu.core_type = #tpu.core_type<tc>, window_params = [{pipeline_mode = #tpu.pipeline_mode<synchronous>, transform_indices = @transform_0, window_bounds = array<i64: 128, 256>}, {pipeline_mode = #tpu.pipeline_mode<synchronous>, transform_indices = @transform_1, window_bounds = array<i64: 128, 128>}, {transform_indices = @transform_2, window_bounds = array<i64: 1, 640, 128>}, {transform_indices = @transform_3, window_bounds = array<i64: 1, 4, 128>}, {pipeline_mode = #tpu.pipeline_mode<synchronous>, transform_indices = @transform_4, window_bounds = array<i64: 128, 256>}]} {
    %c0_i32 = arith.constant 0 : i32
    %0 = arith.cmpi eq, %arg0, %c0_i32 : i32
    %1 = arith.extui %0 : i1 to i32
    %c0_i32_0 = arith.constant 0 : i32
    %2 = arith.cmpi ne, %1, %c0_i32_0 : i32
    scf.if %2 {
      %c0_33 = arith.constant 0 : index
      %c0_34 = arith.constant 0 : index
      %54 = vector.load %arg1[%c0_33, %c0_34] : memref<128x256xf32, #tpu.memory_space<vmem>>, vector<128x256xf32>
      %c0_35 = arith.constant 0 : index
      %c0_36 = arith.constant 0 : index
      %55 = vector.load %arg5[%c0_35, %c0_36] : memref<128x256xf32, #tpu.memory_space<vmem>>, vector<128x256xf32>
      tpu.vector_store %arg5[%c0_35, %c0_36], %54 {strides = array<i32>} : memref<128x256xf32, #tpu.memory_space<vmem>>, vector<128x256xf32>,
    } else {
    }
    %c0 = arith.constant 0 : index
    %c0_1 = arith.constant 0 : index
    %3 = vector.load %arg2[%c0, %c0_1] : memref<128x128xbf16, #tpu.memory_space<vmem>>, vector<128x128xbf16>
    %c0_2 = arith.constant 0 : index
    %c0_3 = arith.constant 0 : index
    %4 = vector.load %arg5[%c0_2, %c0_3] : memref<128x256xf32, #tpu.memory_space<vmem>>, vector<128x256xf32>
    %5 = arith.truncf %4 : vector<128x256xf32> to vector<128x256xbf16>
    %cst = arith.constant dense<0.000000e+00> : vector<128x256xf32>
    %6 = tpu.matmul %3, %5, %cst {dimension_numbers = #tpu.dot_dimension_numbers<[1], [0], [0], [1], [0, 0, 1, 1], [], []>} : vector<128x128xbf16>, vector<128x256xbf16>, vector<128x256xf32> -> vector<128x256xf32>
    %7 = arith.addf %4, %6 : vector<128x256xf32>
    %8 = arith.truncf %7 : vector<128x256xf32> to vector<128x256xbf16>
    %9 = vector.extract_strided_slice %8 {offsets = [0, 128], sizes = [128, 128], strides = [1, 1]} : vector<128x256xbf16> to vector<128x128xbf16>
    %c0_4 = arith.constant 0 : index
    %c0_5 = arith.constant 0 : index
    %c0_6 = arith.constant 0 : index
    %10 = vector.load %arg3[%c0_4, %c0_5, %c0_6] : memref<1x640x128xbf16, #tpu.memory_space<vmem>>, vector<1x256x128xbf16>
    %11 = vector.shape_cast %10 : vector<1x256x128xbf16> to vector<256x128xbf16>
    %c0_7 = arith.constant 0 : index
    %c256 = arith.constant 256 : index
    %c0_8 = arith.constant 0 : index
    %12 = vector.load %arg3[%c0_7, %c256, %c0_8] : memref<1x640x128xbf16, #tpu.memory_space<vmem>>, vector<1x128x128xbf16>
    %13 = vector.shape_cast %12 : vector<1x128x128xbf16> to vector<128x128xbf16>
    %c0_9 = arith.constant 0 : index
    %c384 = arith.constant 384 : index
    %c0_10 = arith.constant 0 : index
    %14 = vector.load %arg3[%c0_9, %c384, %c0_10] : memref<1x640x128xbf16, #tpu.memory_space<vmem>>, vector<1x128x128xbf16>
    %15 = vector.shape_cast %14 : vector<1x128x128xbf16> to vector<128x128xbf16>
    %c0_11 = arith.constant 0 : index
    %c512 = arith.constant 512 : index
    %c0_12 = arith.constant 0 : index
    %16 = vector.load %arg3[%c0_11, %c512, %c0_12] : memref<1x640x128xbf16, #tpu.memory_space<vmem>>, vector<1x128x128xbf16>
    %17 = vector.shape_cast %16 : vector<1x128x128xbf16> to vector<128x128xbf16>
    %c0_13 = arith.constant 0 : index
    %c0_14 = arith.constant 0 : index
    %c0_15 = arith.constant 0 : index
    %18 = vector.load %arg4[%c0_13, %c0_14, %c0_15] : memref<1x4x128xf32, #tpu.memory_space<vmem>>, vector<1x1x128xf32>
    %19 = vector.shape_cast %18 : vector<1x1x128xf32> to vector<1x128xf32>
    %c0_16 = arith.constant 0 : index
    %c1 = arith.constant 1 : index
    %c0_17 = arith.constant 0 : index
    %20 = vector.load %arg4[%c0_16, %c1, %c0_17] : memref<1x4x128xf32, #tpu.memory_space<vmem>>, vector<1x1x128xf32>
    %21 = vector.shape_cast %20 : vector<1x1x128xf32> to vector<1x128xf32>
    %c0_18 = arith.constant 0 : index
    %c2 = arith.constant 2 : index
    %c0_19 = arith.constant 0 : index
    %22 = vector.load %arg4[%c0_18, %c2, %c0_19] : memref<1x4x128xf32, #tpu.memory_space<vmem>>, vector<1x1x128xf32>
    %23 = vector.shape_cast %22 : vector<1x1x128xf32> to vector<1x128xf32>
    %c0_20 = arith.constant 0 : index
    %c3 = arith.constant 3 : index
    %c0_21 = arith.constant 0 : index
    %24 = vector.load %arg4[%c0_20, %c3, %c0_21] : memref<1x4x128xf32, #tpu.memory_space<vmem>>, vector<1x1x128xf32>
    %25 = vector.shape_cast %24 : vector<1x1x128xf32> to vector<1x128xf32>
    %cst_22 = arith.constant dense<0.000000e+00> : vector<128x128xf32>
    %26 = tpu.matmul %8, %11, %cst_22 {dimension_numbers = #tpu.dot_dimension_numbers<[1], [0], [0], [1], [0, 0, 1, 1], [], []>} : vector<128x256xbf16>, vector<256x128xbf16>, vector<128x128xf32> -> vector<128x128xf32>
    %27 = vector.broadcast %19 : vector<1x128xf32> to vector<128x128xf32>
    %28 = arith.addf %26, %27 : vector<128x128xf32>
    %cst_23 = arith.constant 0.000000e+00 : f32
    %29 = vector.broadcast %cst_23 : f32 to vector<128x128xf32>
    %30 = arith.maximumf %28, %29 : vector<128x128xf32>
    %31 = arith.truncf %30 : vector<128x128xf32> to vector<128x128xbf16>
    %cst_24 = arith.constant dense<0.000000e+00> : vector<128x128xf32>
    %32 = tpu.matmul %31, %13, %cst_24 {dimension_numbers = #tpu.dot_dimension_numbers<[1], [0], [0], [1], [0, 0, 1, 1], [], []>} : vector<128x128xbf16>, vector<128x128xbf16>, vector<128x128xf32> -> vector<128x128xf32>
    %33 = vector.broadcast %21 : vector<1x128xf32> to vector<128x128xf32>
    %34 = arith.addf %32, %33 : vector<128x128xf32>
    %cst_25 = arith.constant dense<0.000000e+00> : vector<128x128xf32>
    %35 = tpu.matmul %9, %15, %cst_25 {dimension_numbers = #tpu.dot_dimension_numbers<[1], [0], [0], [1], [0, 0, 1, 1], [], []>} : vector<128x128xbf16>, vector<128x128xbf16>, vector<128x128xf32> -> vector<128x128xf32>
    %36 = vector.broadcast %23 : vector<1x128xf32> to vector<128x128xf32>
    %37 = arith.addf %35, %36 : vector<128x128xf32>
    %cst_26 = arith.constant 0.000000e+00 : f32
    %38 = vector.broadcast %cst_26 : f32 to vector<128x128xf32>
    %39 = arith.maximumf %37, %38 : vector<128x128xf32>
    %40 = arith.truncf %39 : vector<128x128xf32> to vector<128x128xbf16>
    %cst_27 = arith.constant dense<0.000000e+00> : vector<128x128xf32>
    %41 = tpu.matmul %40, %17, %cst_27 {dimension_numbers = #tpu.dot_dimension_numbers<[1], [0], [0], [1], [0, 0, 1, 1], [], []>} : vector<128x128xbf16>, vector<128x128xbf16>, vector<128x128xf32> -> vector<128x128xf32>
    %42 = vector.broadcast %25 : vector<1x128xf32> to vector<128x128xf32>
    %43 = arith.addf %41, %42 : vector<128x128xf32>
    %44 = vector.extract_strided_slice %4 {offsets = [0, 0], sizes = [128, 128], strides = [1, 1]} : vector<128x256xf32> to vector<128x128xf32>
    %cst_28 = arith.constant 0.000000e+00 : f32
    %45 = vector.broadcast %cst_28 : f32 to vector<128x128xf32>
    %46 = arith.maximumf %34, %45 : vector<128x128xf32>
    %47 = arith.addf %44, %46 : vector<128x128xf32>
    %c0_29 = arith.constant 0 : index
    %c0_30 = arith.constant 0 : index
    %48 = vector.load %arg5[%c0_29, %c0_30] : memref<128x256xf32, #tpu.memory_space<vmem>>, vector<128x128xf32>
    tpu.vector_store %arg5[%c0_29, %c0_30], %47 {strides = array<i32>} : memref<128x256xf32, #tpu.memory_space<vmem>>, vector<128x128xf32>,
    %49 = vector.extract_strided_slice %4 {offsets = [0, 128], sizes = [128, 128], strides = [1, 1]} : vector<128x256xf32> to vector<128x128xf32>
    %cst_31 = arith.constant 0.000000e+00 : f32
    %50 = vector.broadcast %cst_31 : f32 to vector<128x128xf32>
    %51 = arith.maximumf %43, %50 : vector<128x128xf32>
    %52 = arith.addf %49, %51 : vector<128x128xf32>
    %c0_32 = arith.constant 0 : index
    %c128 = arith.constant 128 : index
    %53 = vector.load %arg5[%c0_32, %c128] : memref<128x256xf32, #tpu.memory_space<vmem>>, vector<128x128xf32>
    tpu.vector_store %arg5[%c0_32, %c128], %52 {strides = array<i32>} : memref<128x256xf32, #tpu.memory_space<vmem>>, vector<128x128xf32>,
    return
  }
  func.func @transform_0(%arg0: i32) -> (i32, i32) {
    %c0_i32 = arith.constant 0 : i32
    %c0_i32_0 = arith.constant 0 : i32
    %c0_i32_1 = arith.constant 0 : i32
    return %c0_i32, %c0_i32_0 : i32, i32
  }
  func.func @transform_1(%arg0: i32) -> (i32, i32) {
    %c0_i32 = arith.constant 0 : i32
    %c0_i32_0 = arith.constant 0 : i32
    %c0_i32_1 = arith.constant 0 : i32
    return %c0_i32, %c0_i32_0 : i32, i32
  }
  func.func @transform_2(%arg0: i32) -> (i32, i32, i32) {
    %c0_i32 = arith.constant 0 : i32
    %c0_i32_0 = arith.constant 0 : i32
    %c0_i32_1 = arith.constant 0 : i32
    return %arg0, %c0_i32, %c0_i32_0 : i32, i32, i32
  }
  func.func @transform_3(%arg0: i32) -> (i32, i32, i32) {
    %c0_i32 = arith.constant 0 : i32
    %c0_i32_0 = arith.constant 0 : i32
    %c0_i32_1 = arith.constant 0 : i32
    return %arg0, %c0_i32, %c0_i32_0 : i32, i32, i32
  }
  func.func @transform_4(%arg0: i32) -> (i32, i32) {
    %c0_i32 = arith.constant 0 : i32
    %c0_i32_0 = arith.constant 0 : i32
    %c0_i32_1 = arith.constant 0 : i32
    return %c0_i32, %c0_i32_0 : i32, i32
  }
}

</mosaic_0001>

<llo_original>
// kernel: gin_lspe_forward.1
$region0: #{gin_lspe_forward.1}
  #allocation0 [shape = 'u32[]', space=smem, size = 0x4, offset = 0x4, fixed_abs, tag = 'smem constant byte address 0x4 - core index']
  #allocation1 [shape = 'u32[144,128]{1,0:T(1,128)}', space=vmem, size = 0x12000, scoped, tag = 'internal scratch']
  %s0 = inlined_call_operand.vmem [shape: f32[128,256], index: 0, kind: input, shape index: {}]
  %s1 = inlined_call_operand.vmem [shape: bf16[128,128], index: 1, kind: input, shape index: {}]
  %s2 = inlined_call_operand.vmem [shape: bf16[3,640,128], index: 2, kind: input, shape index: {}]
  %s3 = inlined_call_operand.vmem [shape: f32[3,4,128], index: 3, kind: input, shape index: {}]
  %s4 = inlined_call_operand.vmem [shape: f32[128,256], index: 4, kind: output, shape index: {}]
  %s5 = sld [smem:[#allocation0]]
  $region53: #{gin_lspe_forward.1} parent=0
    _
  %s7 = ssub.s32 1, %s5
  %s8 = scalar_select 0, %s7, %s5
  loop: start=0, step=1, limit=5
  $region2: #{gin_lspe_forward.1} parent=0 // loop_pre_header
    _
  $region3: #{gin_lspe_forward.1} parent=0 // loop_header
    %s10 = sphi 0, %s14
    %p11 = scmp.ge.s32.totalorder %s10, 5
    %s18 = sphi 0, %s18
    %s20 = sphi 0, %s18
    %s21 = sphi 0, %s20
    %s35 = sphi 0, %s21
    %s39 = sphi 0, %s39
    %s41 = sphi 0, %s39
    %s42 = sphi 0, %s41
    %s56 = sphi 0, %s42
    %s62 = sphi 0, %s64
    %s65 = sphi 0, %s62
    %s66 = sphi 0, %s65
    %s82 = sphi 0, %s66
    %s88 = sphi 0, %s90
    %s91 = sphi 0, %s88
    %s92 = sphi 0, %s91
    %s108 = sphi 0, %s92
    %s112 = sphi 0, %s112
    %s114 = sphi 0, %s112
    %s115 = sphi 0, %s114
    %s129 = sphi 0, %s115
  $region4: #{gin_lspe_forward.1} parent=0 // loop_header_branch
    %13 = sbr.rel (%p11) target = $region8
  $region5: #{gin_lspe_forward.1} parent=0 // loop_body
    %s15 = ssub.s32 %s10, 1
    %s16 = ssub.s32 %s10, 2
    %s17 = sadd.s32 %s10, 1
    %s19 = sadd.s32 %s18, 1
    %p22 = scmp.eq.s32.totalorder %s10, 2
    %p23 = scmp.ne.s32.totalorder %s18, %s20
    %p24 = scmp.eq.s32.totalorder %s10, 0
    %p25 = por %p23, %p24
    %p26 = scmp.ne.s32.totalorder %s18, %s20
    %p27 = scmp.eq.s32.totalorder %s15, 2
    %p28 = por %p26, %p27
    %p29 = scmp.ne.s32.totalorder %s20, %s21
    %p30 = scmp.eq.s32.totalorder %s15, 0
    %p31 = por %p29, %p30
    %p32 = scmp.ne.s32.totalorder %s20, %s21
    %p33 = scmp.eq.s32.totalorder %s16, 2
    %p34 = por %p32, %p33
    %p36 = scmp.ne.s32.totalorder %s21, %s35
    %p37 = scmp.eq.s32.totalorder %s16, 0
    %p38 = por %p36, %p37
    %s40 = sadd.s32 %s39, 1
    %p43 = scmp.eq.s32.totalorder %s10, 2
    %p44 = scmp.ne.s32.totalorder %s39, %s41
    %p45 = scmp.eq.s32.totalorder %s10, 0
    %p46 = por %p44, %p45
    %p47 = scmp.ne.s32.totalorder %s39, %s41
    %p48 = scmp.eq.s32.totalorder %s15, 2
    %p49 = por %p47, %p48
    %p50 = scmp.ne.s32.totalorder %s41, %s42
    %p51 = scmp.eq.s32.totalorder %s15, 0
    %p52 = por %p50, %p51
    %p53 = scmp.ne.s32.totalorder %s41, %s42
    %p54 = scmp.eq.s32.totalorder %s16, 2
    %p55 = por %p53, %p54
    %p57 = scmp.ne.s32.totalorder %s42, %s56
    %p58 = scmp.eq.s32.totalorder %s16, 0
    %p59 = por %p57, %p58
    %s60 = ssub.s32 %s10, %s17
    %p61 = scmp.eq.s32.totalorder %s60, 0
    %s63 = sadd.s32 %s62, 1
    %s64 = scalar_select %p61, %s62, %s63
    %p67 = pneg %p61
    %p68 = scmp.eq.s32.totalorder %s10, 2
    %p69 = por %p67, %p68
    %p70 = scmp.ne.s32.totalorder %s62, %s65
    %p71 = scmp.eq.s32.totalorder %s10, 0
    %p72 = por %p70, %p71
    %p73 = scmp.ne.s32.totalorder %s62, %s65
    %p74 = scmp.eq.s32.totalorder %s15, 2
    %p75 = por %p73, %p74
    %p76 = scmp.ne.s32.totalorder %s65, %s66
    %p77 = scmp.eq.s32.totalorder %s15, 0
    %p78 = por %p76, %p77
    %p79 = scmp.ne.s32.totalorder %s65, %s66
    %p80 = scmp.eq.s32.totalorder %s16, 2
    %p81 = por %p79, %p80
    %p83 = scmp.ne.s32.totalorder %s66, %s82
    %p84 = scmp.eq.s32.totalorder %s16, 0
    %p85 = por %p83, %p84
    %s86 = ssub.s32 %s10, %s17
    %p87 = scmp.eq.s32.totalorder %s86, 0
    %s89 = sadd.s32 %s88, 1
    %s90 = scalar_select %p87, %s88, %s89
    %p93 = pneg %p87
    %p94 = scmp.eq.s32.totalorder %s10, 2
    %p95 = por %p93, %p94
    %p96 = scmp.ne.s32.totalorder %s88, %s91
    %p97 = scmp.eq.s32.totalorder %s10, 0
    %p98 = por %p96, %p97
    %p99 = scmp.ne.s32.totalorder %s88, %s91
    %p100 = scmp.eq.s32.totalorder %s15, 2
    %p101 = por %p99, %p100
    %p102 = scmp.ne.s32.totalorder %s91, %s92
    %p103 = scmp.eq.s32.totalorder %s15, 0
    %p104 = por %p102, %p103
    %p105 = scmp.ne.s32.totalorder %s91, %s92
    %p106 = scmp.eq.s32.totalorder %s16, 2
    %p107 = por %p105, %p106
    %p109 = scmp.ne.s32.totalorder %s92, %s108
    %p110 = scmp.eq.s32.totalorder %s16, 0
    %p111 = por %p109, %p110
    %s113 = sadd.s32 %s112, 1
    %p116 = scmp.eq.s32.totalorder %s10, 2
    %p117 = scmp.ne.s32.totalorder %s112, %s114
    %p118 = scmp.eq.s32.totalorder %s10, 0
    %p119 = por %p117, %p118
    %p120 = scmp.ne.s32.totalorder %s112, %s114
    %p121 = scmp.eq.s32.totalorder %s15, 2
    %p122 = por %p120, %p121
    %p123 = scmp.ne.s32.totalorder %s114, %s115
    %p124 = scmp.eq.s32.totalorder %s15, 0
    %p125 = por %p123, %p124
    %p126 = scmp.ne.s32.totalorder %s114, %s115
    %p127 = scmp.eq.s32.totalorder %s16, 2
    %p128 = por %p126, %p127
    %p130 = scmp.ne.s32.totalorder %s115, %s129
    %p131 = scmp.eq.s32.totalorder %s16, 0
    %p132 = por %p130, %p131
    %p133 = scmp.le.s32.totalorder 1, %s10
    %p134 = scmp.lt.s32.totalorder %s10, 4
    %p135 = pnand %p133, %p134
    %p136 = pneg %p135
    // Predicated region
    $region9: #{gin_lspe_forward.1} parent=5 // pred_check
      _
    $region10: #{gin_lspe_forward.1} parent=5 // pred_check_branch
      %138 = sbr.rel (%p135) target = $region12
    $region11: #{gin_lspe_forward.1} parent=5 // pred_region
      %s139 = ssub.s32 %s10, 1
      // Predicated region
      $region13: #{gin_lspe_forward.1} parent=11 // pred_check
        %p140 = pneg %p31
      $region14: #{gin_lspe_forward.1} parent=11 // pred_check_branch
        %142 = sbr.rel (%p140) target = $region16
      $region15: #{gin_lspe_forward.1} parent=11 // pred_region
        _
      $region16: #{gin_lspe_forward.1} parent=11 // pred_fallthru
        _
      // Predicated region
      $region17: #{gin_lspe_forward.1} parent=11 // pred_check
        %p143 = pneg %p52
      $region18: #{gin_lspe_forward.1} parent=11 // pred_check_branch
        %145 = sbr.rel (%p143) target = $region20
      $region19: #{gin_lspe_forward.1} parent=11 // pred_region
        _
      $region20: #{gin_lspe_forward.1} parent=11 // pred_fallthru
        _
    $region12: #{gin_lspe_forward.1} parent=5 // pred_fallthru
      _
    %p146 = scmp.lt.s32.totalorder %s10, 3
    // Predicated region
    $region21: #{gin_lspe_forward.1} parent=5 // pred_check
      %p147 = pneg %p146
    $region22: #{gin_lspe_forward.1} parent=5 // pred_check_branch
      %149 = sbr.rel (%p147) target = $region24
    $region23: #{gin_lspe_forward.1} parent=5 // pred_region
      // Predicated region
      $region25: #{gin_lspe_forward.1} parent=23 // pred_check
        %p150 = pneg %p72
      $region26: #{gin_lspe_forward.1} parent=23 // pred_check_branch
        %152 = sbr.rel (%p150) target = $region28
      $region27: #{gin_lspe_forward.1} parent=23 // pred_region
        %p153 = scmp.lt.s32.totalorder %s10, 2
        %s154 = scalar_select %p153, %s10, 2
        %s155 = smul.addr %s154, 80
        %s156 = smul.addr %s155, 4
        %s157 = scalar_lea.vmem %s2, %s156
      $region28: #{gin_lspe_forward.1} parent=23 // pred_fallthru
        _
      // Predicated region
      $region29: #{gin_lspe_forward.1} parent=23 // pred_check
        %p158 = pneg %p98
      $region30: #{gin_lspe_forward.1} parent=23 // pred_check_branch
        %160 = sbr.rel (%p158) target = $region32
      $region31: #{gin_lspe_forward.1} parent=23 // pred_region
        %p161 = scmp.lt.s32.totalorder %s10, 2
        %s162 = scalar_select %p161, %s10, 2
        %s163 = smul.addr %s162, 4
        %s164 = scalar_lea.vmem %s3, %s163
      $region32: #{gin_lspe_forward.1} parent=23 // pred_fallthru
        _
    $region24: #{gin_lspe_forward.1} parent=5 // pred_fallthru
      _
    %p165 = scmp.le.s32.totalorder 1, %s10
    %p166 = scmp.lt.s32.totalorder %s10, 4
    %p167 = pnand %p165, %p166
    %p168 = pneg %p167
    // Predicated region
    $region33: #{gin_lspe_forward.1} parent=5 // pred_check
      _
    $region34: #{gin_lspe_forward.1} parent=5 // pred_check_branch
      %170 = sbr.rel (%p167) target = $region36
    $region35: #{gin_lspe_forward.1} parent=5 // pred_region
      %s171 = ssub.s32 %s10, 1
      %p172 = pneg %p31
      %p173 = pneg %p28
      %p174 = pneg %p52
      %p175 = pneg %p49
      %p176 = scmp.lt.s32.totalorder %s15, 2
      %s177 = scalar_select %p176, %s15, 2
      %s178 = smul.addr %s177, 80
      %s179 = smul.addr %s178, 4
      %s180 = scalar_lea.vmem %s2, %s179
      %p181 = pneg %p78
      %p182 = pneg %p75
      %p183 = scmp.lt.s32.totalorder %s15, 2
      %s184 = scalar_select %p183, %s15, 2
      %s185 = smul.addr %s184, 4
      %s186 = scalar_lea.vmem %s3, %s185
      %p187 = pneg %p104
      %p188 = pneg %p101
      %p189 = pneg %p125
      %p190 = pneg %p122
      %p191 = scmp.lt.s32.totalorder %s15, 2
      %s192 = scalar_select %p191, %s15, 2
      %s193 = smul.addr %s192, 80
      %s194 = smul.addr %s193, 4
      %s195 = scalar_lea.vmem %s2, %s194
      %p196 = scmp.lt.s32.totalorder %s15, 2
      %s197 = scalar_select %p196, %s15, 2
      %s198 = smul.addr %s197, 4
      %s199 = scalar_lea.vmem %s3, %s198
      %p201 = scmp.eq.s32.totalorder %s15, 0
      // Predicated region
      $region37: #{gin_lspe_forward.1} parent=35 // pred_check
        %p202 = pneg %p201
      $region38: #{gin_lspe_forward.1} parent=35 // pred_check_branch
        %204 = sbr.rel (%p202) target = $region40
      $region39: #{gin_lspe_forward.1} parent=35 // pred_region
        %v205 = vld [vmem:[%s0] sm:$0xff]
        %v206 = vld [vmem:[%s0 + $0x8] sm:$0xff]
        %v207 = vld [vmem:[%s0 + $0x10] sm:$0xff]
        %v208 = vld [vmem:[%s0 + $0x18] sm:$0xff]
        %v209 = vld [vmem:[%s0 + $0x20] sm:$0xff]
        %v210 = vld [vmem:[%s0 + $0x28] sm:$0xff]
        %v211 = vld [vmem:[%s0 + $0x30] sm:$0xff]
        %v212 = vld [vmem:[%s0 + $0x38] sm:$0xff]
        %v213 = vld [vmem:[%s0 + $0x40] sm:$0xff]
        %v214 = vld [vmem:[%s0 + $0x48] sm:$0xff]
        %v215 = vld [vmem:[%s0 + $0x50] sm:$0xff]
        %v216 = vld [vmem:[%s0 + $0x58] sm:$0xff]
        %v217 = vld [vmem:[%s0 + $0x60] sm:$0xff]
        %v218 = vld [vmem:[%s0 + $0x68] sm:$0xff]
        %v219 = vld [vmem:[%s0 + $0x70] sm:$0xff]
        %v220 = vld [vmem:[%s0 + $0x78] sm:$0xff]
        %v221 = vld [vmem:[%s0 + $0x80] sm:$0xff]
        %v222 = vld [vmem:[%s0 + $0x88] sm:$0xff]
        %v223 = vld [vmem:[%s0 + $0x90] sm:$0xff]
        %v224 = vld [vmem:[%s0 + $0x98] sm:$0xff]
        %v225 = vld [vmem:[%s0 + $0xa0] sm:$0xff]
        %v226 = vld [vmem:[%s0 + $0xa8] sm:$0xff]
        %v227 = vld [vmem:[%s0 + $0xb0] sm:$0xff]
        %v228 = vld [vmem:[%s0 + $0xb8] sm:$0xff]
        %v229 = vld [vmem:[%s0 + $0xc0] sm:$0xff]
        %v230 = vld [vmem:[%s0 + $0xc8] sm:$0xff]
        %v231 = vld [vmem:[%s0 + $0xd0] sm:$0xff]
        %v232 = vld [vmem:[%s0 + $0xd8] sm:$0xff]
        %v233 = vld [vmem:[%s0 + $0xe0] sm:$0xff]
        %v234 = vld [vmem:[%s0 + $0xe8] sm:$0xff]
        %v235 = vld [vmem:[%s0 + $0xf0] sm:$0xff]
        %v236 = vld [vmem:[%s0 + $0xf8] sm:$0xff]
        %237 = vst [vmem:[%s4] sm:$0xff] %v205
        %238 = vst [vmem:[%s4 + $0x8] sm:$0xff] %v206
        %239 = vst [vmem:[%s4 + $0x10] sm:$0xff] %v207
        %240 = vst [vmem:[%s4 + $0x18] sm:$0xff] %v208
        %241 = vst [vmem:[%s4 + $0x20] sm:$0xff] %v209
        %242 = vst [vmem:[%s4 + $0x28] sm:$0xff] %v210
        %243 = vst [vmem:[%s4 + $0x30] sm:$0xff] %v211
        %244 = vst [vmem:[%s4 + $0x38] sm:$0xff] %v212
        %245 = vst [vmem:[%s4 + $0x40] sm:$0xff] %v213
        %246 = vst [vmem:[%s4 + $0x48] sm:$0xff] %v214
        %247 = vst [vmem:[%s4 + $0x50] sm:$0xff] %v215
        %248 = vst [vmem:[%s4 + $0x58] sm:$0xff] %v216
        %249 = vst [vmem:[%s4 + $0x60] sm:$0xff] %v217
        %250 = vst [vmem:[%s4 + $0x68] sm:$0xff] %v218
        %251 = vst [vmem:[%s4 + $0x70] sm:$0xff] %v219
        %252 = vst [vmem:[%s4 + $0x78] sm:$0xff] %v220
        %253 = vst [vmem:[%s4 + $0x80] sm:$0xff] %v221
        %254 = vst [vmem:[%s4 + $0x88] sm:$0xff] %v222
        %255 = vst [vmem:[%s4 + $0x90] sm:$0xff] %v223
        %256 = vst [vmem:[%s4 + $0x98] sm:$0xff] %v224
        %257 = vst [vmem:[%s4 + $0xa0] sm:$0xff] %v225
        %258 = vst [vmem:[%s4 + $0xa8] sm:$0xff] %v226
        %259 = vst [vmem:[%s4 + $0xb0] sm:$0xff] %v227
        %260 = vst [vmem:[%s4 + $0xb8] sm:$0xff] %v228
        %261 = vst [vmem:[%s4 + $0xc0] sm:$0xff] %v229
        %262 = vst [vmem:[%s4 + $0xc8] sm:$0xff] %v230
        %263 = vst [vmem:[%s4 + $0xd0] sm:$0xff] %v231
        %264 = vst [vmem:[%s4 + $0xd8] sm:$0xff] %v232
        %265 = vst [vmem:[%s4 + $0xe0] sm:$0xff] %v233
        %266 = vst [vmem:[%s4 + $0xe8] sm:$0xff] %v234
        %267 = vst [vmem:[%s4 + $0xf0] sm:$0xff] %v235
        %268 = vst [vmem:[%s4 + $0xf8] sm:$0xff] %v236
      $region40: #{gin_lspe_forward.1} parent=35 // pred_fallthru
        _
      %v269 = vld [vmem:[%s1] sm:$0xf]
      %v270 = vld [vmem:[%s1 + $0x4] sm:$0xf]
      %v271 = vld [vmem:[%s1 + $0x8] sm:$0xf]
      %v272 = vld [vmem:[%s1 + $0xc] sm:$0xf]
      %v273 = vld [vmem:[%s1 + $0x10] sm:$0xf]
      %v274 = vld [vmem:[%s1 + $0x14] sm:$0xf]
      %v275 = vld [vmem:[%s1 + $0x18] sm:$0xf]
      %v276 = vld [vmem:[%s1 + $0x1c] sm:$0xf]
      %v277 = vld [vmem:[%s1 + $0x20] sm:$0xf]
      %v278 = vld [vmem:[%s1 + $0x24] sm:$0xf]
      %v279 = vld [vmem:[%s1 + $0x28] sm:$0xf]
      %v280 = vld [vmem:[%s1 + $0x2c] sm:$0xf]
      %v281 = vld [vmem:[%s1 + $0x30] sm:$0xf]
      %v282 = vld [vmem:[%s1 + $0x34] sm:$0xf]
      %v283 = vld [vmem:[%s1 + $0x38] sm:$0xf]
      %v284 = vld [vmem:[%s1 + $0x3c] sm:$0xf]
      %v285 = vld [vmem:[%s4] sm:$0xff]
      %v286 = vld [vmem:[%s4 + $0x8] sm:$0xff]
      %v287 = vld [vmem:[%s4 + $0x10] sm:$0xff]
      %v288 = vld [vmem:[%s4 + $0x18] sm:$0xff]
      %v289 = vld [vmem:[%s4 + $0x20] sm:$0xff]
      %v290 = vld [vmem:[%s4 + $0x28] sm:$0xff]
      %v291 = vld [vmem:[%s4 + $0x30] sm:$0xff]
      %v292 = vld [vmem:[%s4 + $0x38] sm:$0xff]
      %v293 = vld [vmem:[%s4 + $0x40] sm:$0xff]
      %v294 = vld [vmem:[%s4 + $0x48] sm:$0xff]
      %v295 = vld [vmem:[%s4 + $0x50] sm:$0xff]
      %v296 = vld [vmem:[%s4 + $0x58] sm:$0xff]
      %v297 = vld [vmem:[%s4 + $0x60] sm:$0xff]
      %v298 = vld [vmem:[%s4 + $0x68] sm:$0xff]
      %v299 = vld [vmem:[%s4 + $0x70] sm:$0xff]
      %v300 = vld [vmem:[%s4 + $0x78] sm:$0xff]
      %v301 = vld [vmem:[%s4 + $0x80] sm:$0xff]
      %v302 = vld [vmem:[%s4 + $0x88] sm:$0xff]
      %v303 = vld [vmem:[%s4 + $0x90] sm:$0xff]
      %v304 = vld [vmem:[%s4 + $0x98] sm:$0xff]
      %v305 = vld [vmem:[%s4 + $0xa0] sm:$0xff]
      %v306 = vld [vmem:[%s4 + $0xa8] sm:$0xff]
      %v307 = vld [vmem:[%s4 + $0xb0] sm:$0xff]
      %v308 = vld [vmem:[%s4 + $0xb8] sm:$0xff]
      %v309 = vld [vmem:[%s4 + $0xc0] sm:$0xff]
      %v310 = vld [vmem:[%s4 + $0xc8] sm:$0xff]
      %v311 = vld [vmem:[%s4 + $0xd0] sm:$0xff]
      %v312 = vld [vmem:[%s4 + $0xd8] sm:$0xff]
      %v313 = vld [vmem:[%s4 + $0xe0] sm:$0xff]
      %v314 = vld [vmem:[%s4 + $0xe8] sm:$0xff]
      %v315 = vld [vmem:[%s4 + $0xf0] sm:$0xff]
      %v316 = vld [vmem:[%s4 + $0xf8] sm:$0xff]
      %v317 = vpack.c.bf16 %v287, %v285
      %v318 = vpack.c.bf16 %v288, %v286
      %v319 = vpack.c.bf16 %v291, %v289
      %v320 = vpack.c.bf16 %v292, %v290
      %v321 = vpack.c.bf16 %v295, %v293
      %v322 = vpack.c.bf16 %v296, %v294
      %v323 = vpack.c.bf16 %v299, %v297
      %v324 = vpack.c.bf16 %v300, %v298
      %v325 = vpack.c.bf16 %v303, %v301
      %v326 = vpack.c.bf16 %v304, %v302
      %v327 = vpack.c.bf16 %v307, %v305
      %v328 = vpack.c.bf16 %v308, %v306
      %v329 = vpack.c.bf16 %v311, %v309
      %v330 = vpack.c.bf16 %v312, %v310
      %v331 = vpack.c.bf16 %v315, %v313
      %v332 = vpack.c.bf16 %v316, %v314
      %v349 = vunpack.c.l.b16 %v269
      %v350 = vunpack.c.l.b16 %v270
      %v351 = vunpack.c.l.b16 %v271
      %v352 = vunpack.c.l.b16 %v272
      %v353 = vunpack.c.l.b16 %v273
      %v354 = vunpack.c.l.b16 %v274
      %v355 = vunpack.c.l.b16 %v275
      %v356 = vunpack.c.l.b16 %v276
      %v357 = vunpack.c.l.b16 %v277
      %v358 = vunpack.c.l.b16 %v278
      %v359 = vunpack.c.l.b16 %v279
      %v360 = vunpack.c.l.b16 %v280
      %v361 = vunpack.c.l.b16 %v281
      %v362 = vunpack.c.l.b16 %v282
      %v363 = vunpack.c.l.b16 %v283
      %v364 = vunpack.c.l.b16 %v284
      %v365 = vpack.c.b16 %v350, %v349
      %v366 = vpack.c.b16 %v352, %v351
      %v367 = vpack.c.b16 %v354, %v353
      %v368 = vpack.c.b16 %v356, %v355
      %v369 = vpack.c.b16 %v358, %v357
      %v370 = vpack.c.b16 %v360, %v359
      %v371 = vpack.c.b16 %v362, %v361
      %v372 = vpack.c.b16 %v364, %v363
      %381 = vmatprep.subr.bf16.mxu0 %v318
      %382 = vmatpush1.bf16.msra.mxu0 %v317
      %383 = vmatprep.subr.bf16.mxu0 %v320
      %384 = vmatpush1.bf16.msra.mxu0 %v319
      %385 = vmatprep.subr.bf16.mxu0 %v322
      %386 = vmatpush1.bf16.msra.mxu0 %v321
      %387 = vmatprep.subr.bf16.mxu0 %v324
      %388 = vmatpush1.bf16.msra.mxu0 %v323
      %389 = vmatprep.subr.bf16.mxu0 %v326
      %390 = vmatpush1.bf16.msra.mxu0 %v325
      %391 = vmatprep.subr.bf16.mxu0 %v328
      %392 = vmatpush1.bf16.msra.mxu0 %v327
      %393 = vmatprep.subr.bf16.mxu0 %v330
      %394 = vmatpush1.bf16.msra.mxu0 %v329
      %395 = vmatprep.subr.bf16.mxu0 %v332
      %396 = vmatpush1.bf16.msra.mxu0 %v331
      %397 = vmatprep.subr.bf16.mxu0 0
      %398 = vmatpush1.bf16.msra.mxu0 0
      %399 = vmatprep.subr.bf16.mxu0 0
      %400 = vmatpush1.bf16.msra.mxu0 0
      %401 = vmatprep.subr.bf16.mxu0 0
      %402 = vmatpush1.bf16.msra.mxu0 0
      %403 = vmatprep.subr.bf16.mxu0 0
      %404 = vmatpush1.bf16.msra.mxu0 0
      %405 = vmatprep.subr.bf16.mxu0 0
      %406 = vmatpush1.bf16.msra.mxu0 0
      %407 = vmatprep.subr.bf16.mxu0 0
      %408 = vmatpush1.bf16.msra.mxu0 0
      %409 = vmatprep.subr.bf16.mxu0 0
      %410 = vmatpush1.bf16.msra.mxu0 0
      %411 = vmatprep.subr.bf16.mxu0 0
      %412 = vmatpush1.bf16.msra.mxu0 0
      %413 = vmatprep.mubr.bf16.mxu0 0
      %414 = vmatmul.mubr.bf16.gmra.mrb[0].mxu0 %v365
      %v415 = vpop.f32.mrb[0].mxu0
      %v416 = vadd.f32 0.0, %v415
      %v417 = vpop.f32.mrb[0].mxu0
      %v418 = vadd.f32 0.0, %v417
      %v419 = vpop.f32.mrb[0].mxu0
      %v420 = vadd.f32 0.0, %v419
      %v421 = vpop.f32.mrb[0].mxu0
      %v422 = vadd.f32 0.0, %v421
      %423 = vmatprep.mubr.bf16.mxu0 0
      %424 = vmatmul.mubr.bf16.gmra.mrb[0].mxu0 %v366
      %v425 = vpop.f32.mrb[0].mxu0
      %v426 = vadd.f32 0.0, %v425
      %v427 = vpop.f32.mrb[0].mxu0
      %v428 = vadd.f32 0.0, %v427
      %v429 = vpop.f32.mrb[0].mxu0
      %v430 = vadd.f32 0.0, %v429
      %v431 = vpop.f32.mrb[0].mxu0
      %v432 = vadd.f32 0.0, %v431
      %433 = vmatprep.mubr.bf16.mxu0 0
      %434 = vmatmul.mubr.bf16.gmra.mrb[0].mxu0 %v367
      %v435 = vpop.f32.mrb[0].mxu0
      %v436 = vadd.f32 0.0, %v435
      %v437 = vpop.f32.mrb[0].mxu0
      %v438 = vadd.f32 0.0, %v437
      %v439 = vpop.f32.mrb[0].mxu0
      %v440 = vadd.f32 0.0, %v439
      %v441 = vpop.f32.mrb[0].mxu0
      %v442 = vadd.f32 0.0, %v441
      %443 = vmatprep.mubr.bf16.mxu0 0
      %444 = vmatmul.mubr.bf16.gmra.mrb[0].mxu0 %v368
      %v445 = vpop.f32.mrb[0].mxu0
      %v446 = vadd.f32 0.0, %v445
      %v447 = vpop.f32.mrb[0].mxu0
      %v448 = vadd.f32 0.0, %v447
      %v449 = vpop.f32.mrb[0].mxu0
      %v450 = vadd.f32 0.0, %v449
      %v451 = vpop.f32.mrb[0].mxu0
      %v452 = vadd.f32 0.0, %v451
      %453 = vmatprep.mubr.bf16.mxu0 0
      %454 = vmatmul.mubr.bf16.gmra.mrb[0].mxu0 %v369
      %v455 = vpop.f32.mrb[0].mxu0
      %v456 = vadd.f32 0.0, %v455
      %v457 = vpop.f32.mrb[0].mxu0
      %v458 = vadd.f32 0.0, %v457
      %v459 = vpop.f32.mrb[0].mxu0
      %v460 = vadd.f32 0.0, %v459
      %v461 = vpop.f32.mrb[0].mxu0
      %v462 = vadd.f32 0.0, %v461
      %463 = vmatprep.mubr.bf16.mxu0 0
      %464 = vmatmul.mubr.bf16.gmra.mrb[0].mxu0 %v370
      %v465 = vpop.f32.mrb[0].mxu0
      %v466 = vadd.f32 0.0, %v465
      %v467 = vpop.f32.mrb[0].mxu0
      %v468 = vadd.f32 0.0, %v467
      %v469 = vpop.f32.mrb[0].mxu0
      %v470 = vadd.f32 0.0, %v469
      %v471 = vpop.f32.mrb[0].mxu0
      %v472 = vadd.f32 0.0, %v471
      %473 = vmatprep.mubr.bf16.mxu0 0
      %474 = vmatmul.mubr.bf16.gmra.mrb[0].mxu0 %v371
      %v475 = vpop.f32.mrb[0].mxu0
      %v476 = vadd.f32 0.0, %v475
      %v477 = vpop.f32.mrb[0].mxu0
      %v478 = vadd.f32 0.0, %v477
      %v479 = vpop.f32.mrb[0].mxu0
      %v480 = vadd.f32 0.0, %v479
      %v481 = vpop.f32.mrb[0].mxu0
      %v482 = vadd.f32 0.0, %v481
      %483 = vmatprep.mubr.bf16.mxu0 0
      %484 = vmatmul.mubr.bf16.gmra.mrb[0].mxu0 %v372
      %v485 = vpop.f32.mrb[0].mxu0
      %v486 = vadd.f32 0.0, %v485
      %v487 = vpop.f32.mrb[0].mxu0
      %v488 = vadd.f32 0.0, %v487
      %v489 = vpop.f32.mrb[0].mxu0
      %v490 = vadd.f32 0.0, %v489
      %v491 = vpop.f32.mrb[0].mxu0
      %v492 = vadd.f32 0.0, %v491
      %493 = vdwg.mxu0
      %v494 = vadd.f32 %v285, %v416
      %v495 = vadd.f32 %v286, %v418
      %v496 = vadd.f32 %v287, %v420
      %v497 = vadd.f32 %v288, %v422
      %v498 = vadd.f32 %v289, %v426
      %v499 = vadd.f32 %v290, %v428
      %v500 = vadd.f32 %v291, %v430
      %v501 = vadd.f32 %v292, %v432
      %v502 = vadd.f32 %v293, %v436
      %v503 = vadd.f32 %v294, %v438
      %v504 = vadd.f32 %v295, %v440
      %v505 = vadd.f32 %v296, %v442
      %v506 = vadd.f32 %v297, %v446
      %v507 = vadd.f32 %v298, %v448
      %v508 = vadd.f32 %v299, %v450
      %v509 = vadd.f32 %v300, %v452
      %v510 = vadd.f32 %v301, %v456
      %v511 = vadd.f32 %v302, %v458
      %v512 = vadd.f32 %v303, %v460
      %v513 = vadd.f32 %v304, %v462
      %v514 = vadd.f32 %v305, %v466
      %v515 = vadd.f32 %v306, %v468
      %v516 = vadd.f32 %v307, %v470
      %v517 = vadd.f32 %v308, %v472
      %v518 = vadd.f32 %v309, %v476
      %v519 = vadd.f32 %v310, %v478
      %v520 = vadd.f32 %v311, %v480
      %v521 = vadd.f32 %v312, %v482
      %v522 = vadd.f32 %v313, %v486
      %v523 = vadd.f32 %v314, %v488
      %v524 = vadd.f32 %v315, %v490
      %v525 = vadd.f32 %v316, %v492
      %v526 = vpack.c.bf16 %v496, %v494
      %v527 = vpack.c.bf16 %v497, %v495
      %v528 = vpack.c.bf16 %v500, %v498
      %v529 = vpack.c.bf16 %v501, %v499
      %v530 = vpack.c.bf16 %v504, %v502
      %v531 = vpack.c.bf16 %v505, %v503
      %v532 = vpack.c.bf16 %v508, %v506
      %v533 = vpack.c.bf16 %v509, %v507
      %v534 = vpack.c.bf16 %v512, %v510
      %v535 = vpack.c.bf16 %v513, %v511
      %v536 = vpack.c.bf16 %v516, %v514
      %v537 = vpack.c.bf16 %v517, %v515
      %v538 = vpack.c.bf16 %v520, %v518
      %v539 = vpack.c.bf16 %v521, %v519
      %v540 = vpack.c.bf16 %v524, %v522
      %v541 = vpack.c.bf16 %v525, %v523
      %v542 = vld [vmem:[%s195] sm:$0xf]
      %v543 = vld [vmem:[%s195 + $0x4] sm:$0xf]
      %v544 = vld [vmem:[%s195 + $0x8] sm:$0xf]
      %v545 = vld [vmem:[%s195 + $0xc] sm:$0xf]
      %v546 = vld [vmem:[%s195 + $0x10] sm:$0xf]
      %v547 = vld [vmem:[%s195 + $0x14] sm:$0xf]
      %v548 = vld [vmem:[%s195 + $0x18] sm:$0xf]
      %v549 = vld [vmem:[%s195 + $0x1c] sm:$0xf]
      %v550 = vld [vmem:[%s195 + $0x20] sm:$0xf]
      %v551 = vld [vmem:[%s195 + $0x24] sm:$0xf]
      %v552 = vld [vmem:[%s195 + $0x28] sm:$0xf]
      %v553 = vld [vmem:[%s195 + $0x2c] sm:$0xf]
      %v554 = vld [vmem:[%s195 + $0x30] sm:$0xf]
      %v555 = vld [vmem:[%s195 + $0x34] sm:$0xf]
      %v556 = vld [vmem:[%s195 + $0x38] sm:$0xf]
      %v557 = vld [vmem:[%s195 + $0x3c] sm:$0xf]
      %v558 = vld [vmem:[%s195 + $0x40] sm:$0xf]
      %v559 = vld [vmem:[%s195 + $0x44] sm:$0xf]
      %v560 = vld [vmem:[%s195 + $0x48] sm:$0xf]
      %v561 = vld [vmem:[%s195 + $0x4c] sm:$0xf]
      %v562 = vld [vmem:[%s195 + $0x50] sm:$0xf]
      %v563 = vld [vmem:[%s195 + $0x54] sm:$0xf]
      %v564 = vld [vmem:[%s195 + $0x58] sm:$0xf]
      %v565 = vld [vmem:[%s195 + $0x5c] sm:$0xf]
      %v566 = vld [vmem:[%s195 + $0x60] sm:$0xf]
      %v567 = vld [vmem:[%s195 + $0x64] sm:$0xf]
      %v568 = vld [vmem:[%s195 + $0x68] sm:$0xf]
      %v569 = vld [vmem:[%s195 + $0x6c] sm:$0xf]
      %v570 = vld [vmem:[%s195 + $0x70] sm:$0xf]
      %v571 = vld [vmem:[%s195 + $0x74] sm:$0xf]
      %v572 = vld [vmem:[%s195 + $0x78] sm:$0xf]
      %v573 = vld [vmem:[%s195 + $0x7c] sm:$0xf]
      %v574 = vld [vmem:[%s195 + $0x80] sm:$0xf]
      %v575 = vld [vmem:[%s195 + $0x84] sm:$0xf]
      %v576 = vld [vmem:[%s195 + $0x88] sm:$0xf]
      %v577 = vld [vmem:[%s195 + $0x8c] sm:$0xf]
      %v578 = vld [vmem:[%s195 + $0x90] sm:$0xf]
      %v579 = vld [vmem:[%s195 + $0x94] sm:$0xf]
      %v580 = vld [vmem:[%s195 + $0x98] sm:$0xf]
      %v581 = vld [vmem:[%s195 + $0x9c] sm:$0xf]
      %v582 = vld [vmem:[%s195 + $0xa0] sm:$0xf]
      %v583 = vld [vmem:[%s195 + $0xa4] sm:$0xf]
      %v584 = vld [vmem:[%s195 + $0xa8] sm:$0xf]
      %v585 = vld [vmem:[%s195 + $0xac] sm:$0xf]
      %v586 = vld [vmem:[%s195 + $0xb0] sm:$0xf]
      %v587 = vld [vmem:[%s195 + $0xb4] sm:$0xf]
      %v588 = vld [vmem:[%s195 + $0xb8] sm:$0xf]
      %v589 = vld [vmem:[%s195 + $0xbc] sm:$0xf]
      %v590 = vld [vmem:[%s195 + $0xc0] sm:$0xf]
      %v591 = vld [vmem:[%s195 + $0xc4] sm:$0xf]
      %v592 = vld [vmem:[%s195 + $0xc8] sm:$0xf]
      %v593 = vld [vmem:[%s195 + $0xcc] sm:$0xf]
      %v594 = vld [vmem:[%s195 + $0xd0] sm:$0xf]
      %v595 = vld [vmem:[%s195 + $0xd4] sm:$0xf]
      %v596 = vld [vmem:[%s195 + $0xd8] sm:$0xf]
      %v597 = vld [vmem:[%s195 + $0xdc] sm:$0xf]
      %v598 = vld [vmem:[%s195 + $0xe0] sm:$0xf]
      %v599 = vld [vmem:[%s195 + $0xe4] sm:$0xf]
      %v600 = vld [vmem:[%s195 + $0xe8] sm:$0xf]
      %v601 = vld [vmem:[%s195 + $0xec] sm:$0xf]
      %v602 = vld [vmem:[%s195 + $0xf0] sm:$0xf]
      %v603 = vld [vmem:[%s195 + $0xf4] sm:$0xf]
      %v604 = vld [vmem:[%s195 + $0xf8] sm:$0xf]
      %v605 = vld [vmem:[%s195 + $0xfc] sm:$0xf]
      %v606 = vld [vmem:[%s195 + $0x100] sm:$0xf]
      %v607 = vld [vmem:[%s195 + $0x104] sm:$0xf]
      %v608 = vld [vmem:[%s195 + $0x108] sm:$0xf]
      %v609 = vld [vmem:[%s195 + $0x10c] sm:$0xf]
      %v610 = vld [vmem:[%s195 + $0x110] sm:$0xf]
      %v611 = vld [vmem:[%s195 + $0x114] sm:$0xf]
      %v612 = vld [vmem:[%s195 + $0x118] sm:$0xf]
      %v613 = vld [vmem:[%s195 + $0x11c] sm:$0xf]
      %v614 = vld [vmem:[%s195 + $0x120] sm:$0xf]
      %v615 = vld [vmem:[%s195 + $0x124] sm:$0xf]
      %v616 = vld [vmem:[%s195 + $0x128] sm:$0xf]
      %v617 = vld [vmem:[%s195 + $0x12c] sm:$0xf]
      %v618 = vld [vmem:[%s195 + $0x130] sm:$0xf]
      %v619 = vld [vmem:[%s195 + $0x134] sm:$0xf]
      %v620 = vld [vmem:[%s195 + $0x138] sm:$0xf]
      %v621 = vld [vmem:[%s195 + $0x13c] sm:$0xf]
      %v622 = vld [vmem:[%s199] sm:$0x1]
      %v623 = vld [vmem:[%s199 + $0x1] sm:$0x1]
      %v624 = vld [vmem:[%s199 + $0x2] sm:$0x1]
      %v625 = vld [vmem:[%s199 + $0x3] sm:$0x1]
      %v626 = vlaneseq
      %v627 = vshrl.u32 %v626, 7
      %v628 = vsub.s32 0, %v627
      %v629 = vrot.slane %v622, %v628
      %v662 = vunpack.c.l.b16 %v542
      %v663 = vunpack.c.l.b16 %v543
      %v664 = vunpack.c.l.b16 %v544
      %v665 = vunpack.c.l.b16 %v545
      %v666 = vunpack.c.l.b16 %v546
      %v667 = vunpack.c.l.b16 %v547
      %v668 = vunpack.c.l.b16 %v548
      %v669 = vunpack.c.l.b16 %v549
      %v670 = vunpack.c.l.b16 %v550
      %v671 = vunpack.c.l.b16 %v551
      %v672 = vunpack.c.l.b16 %v552
      %v673 = vunpack.c.l.b16 %v553
      %v674 = vunpack.c.l.b16 %v554
      %v675 = vunpack.c.l.b16 %v555
      %v676 = vunpack.c.l.b16 %v556
      %v677 = vunpack.c.l.b16 %v557
      %v678 = vunpack.c.l.b16 %v558
      %v679 = vunpack.c.l.b16 %v559
      %v680 = vunpack.c.l.b16 %v560
      %v681 = vunpack.c.l.b16 %v561
      %v682 = vunpack.c.l.b16 %v562
      %v683 = vunpack.c.l.b16 %v563
      %v684 = vunpack.c.l.b16 %v564
      %v685 = vunpack.c.l.b16 %v565
      %v686 = vunpack.c.l.b16 %v566
      %v687 = vunpack.c.l.b16 %v567
      %v688 = vunpack.c.l.b16 %v568
      %v689 = vunpack.c.l.b16 %v569
      %v690 = vunpack.c.l.b16 %v570
      %v691 = vunpack.c.l.b16 %v571
      %v692 = vunpack.c.l.b16 %v572
      %v693 = vunpack.c.l.b16 %v573
      %v694 = vpack.c.b16 %v663, %v662
      %v695 = vpack.c.b16 %v665, %v664
      %v696 = vpack.c.b16 %v667, %v666
      %v697 = vpack.c.b16 %v669, %v668
      %v698 = vpack.c.b16 %v671, %v670
      %v699 = vpack.c.b16 %v673, %v672
      %v700 = vpack.c.b16 %v675, %v674
      %v701 = vpack.c.b16 %v677, %v676
      %v702 = vpack.c.b16 %v679, %v678
      %v703 = vpack.c.b16 %v681, %v680
      %v704 = vpack.c.b16 %v683, %v682
      %v705 = vpack.c.b16 %v685, %v684
      %v706 = vpack.c.b16 %v687, %v686
      %v707 = vpack.c.b16 %v689, %v688
      %v708 = vpack.c.b16 %v691, %v690
      %v709 = vpack.c.b16 %v693, %v692
      %726 = vmatprep.subr.bf16.mxu0 0
      %727 = vmatpush1.bf16.msra.mxu0 %v694
      %728 = vmatprep.subr.bf16.mxu0 0
      %729 = vmatpush1.bf16.msra.mxu0 %v695
      %730 = vmatprep.subr.bf16.mxu0 0
      %731 = vmatpush1.bf16.msra.mxu0 %v696
      %732 = vmatprep.subr.bf16.mxu0 0
      %733 = vmatpush1.bf16.msra.mxu0 %v697
      %734 = vmatprep.subr.bf16.mxu0 0
      %735 = vmatpush1.bf16.msra.mxu0 %v698
      %736 = vmatprep.subr.bf16.mxu0 0
      %737 = vmatpush1.bf16.msra.mxu0 %v699
      %738 = vmatprep.subr.bf16.mxu0 0
      %739 = vmatpush1.bf16.msra.mxu0 %v700
      %740 = vmatprep.subr.bf16.mxu0 0
      %741 = vmatpush1.bf16.msra.mxu0 %v701
      %742 = vmatprep.subr.bf16.mxu0 0
      %743 = vmatpush1.bf16.msra.mxu0 %v702
      %744 = vmatprep.subr.bf16.mxu0 0
      %745 = vmatpush1.bf16.msra.mxu0 %v703
      %746 = vmatprep.subr.bf16.mxu0 0
      %747 = vmatpush1.bf16.msra.mxu0 %v704
      %748 = vmatprep.subr.bf16.mxu0 0
      %749 = vmatpush1.bf16.msra.mxu0 %v705
      %750 = vmatprep.subr.bf16.mxu0 0
      %751 = vmatpush1.bf16.msra.mxu0 %v706
      %752 = vmatprep.subr.bf16.mxu0 0
      %753 = vmatpush1.bf16.msra.mxu0 %v707
      %754 = vmatprep.subr.bf16.mxu0 0
      %755 = vmatpush1.bf16.msra.mxu0 %v708
      %756 = vmatprep.subr.bf16.mxu0 0
      %757 = vmatpush1.bf16.msra.mxu0 %v709
      %758 = vmatprep.mubr.bf16.mxu0 %v527
      %759 = vmatmul.mubr.bf16.gmra.mrb[0].mxu0 %v526
      %v760 = vpop.f32.mrb[0].mxu0
      %v761 = vadd.f32 %v629, %v760
      %v762 = vpop.f32.mrb[0].mxu0
      %v763 = vpop.f32.mrb[0].mxu0
      %v764 = vadd.f32 %v629, %v763
      %v765 = vpop.f32.mrb[0].mxu0
      %766 = vmatprep.mubr.bf16.mxu0 %v529
      %767 = vmatmul.mubr.bf16.gmra.mrb[0].mxu0 %v528
      %v768 = vpop.f32.mrb[0].mxu0
      %v769 = vadd.f32 %v629, %v768
      %v770 = vpop.f32.mrb[0].mxu0
      %v771 = vpop.f32.mrb[0].mxu0
      %v772 = vadd.f32 %v629, %v771
      %v773 = vpop.f32.mrb[0].mxu0
      %774 = vmatprep.mubr.bf16.mxu0 %v531
      %775 = vmatmul.mubr.bf16.gmra.mrb[0].mxu0 %v530
      %v776 = vpop.f32.mrb[0].mxu0
      %v777 = vadd.f32 %v629, %v776
      %v778 = vpop.f32.mrb[0].mxu0
      %v779 = vpop.f32.mrb[0].mxu0
      %v780 = vadd.f32 %v629, %v779
      %v781 = vpop.f32.mrb[0].mxu0
      %782 = vmatprep.mubr.bf16.mxu0 %v533
      %783 = vmatmul.mubr.bf16.gmra.mrb[0].mxu0 %v532
      %v784 = vpop.f32.mrb[0].mxu0
      %v785 = vadd.f32 %v629, %v784
      %v786 = vpop.f32.mrb[0].mxu0
      %v787 = vpop.f32.mrb[0].mxu0
      %v788 = vadd.f32 %v629, %v787
      %v789 = vpop.f32.mrb[0].mxu0
      %790 = vmatprep.mubr.bf16.mxu0 %v535
      %791 = vmatmul.mubr.bf16.gmra.mrb[0].mxu0 %v534
      %v792 = vpop.f32.mrb[0].mxu0
      %v793 = vadd.f32 %v629, %v792
      %v794 = vpop.f32.mrb[0].mxu0
      %v795 = vpop.f32.mrb[0].mxu0
      %v796 = vadd.f32 %v629, %v795
      %v797 = vpop.f32.mrb[0].mxu0
      %798 = vmatprep.mubr.bf16.mxu0 %v537
      %799 = vmatmul.mubr.bf16.gmra.mrb[0].mxu0 %v536
      %v800 = vpop.f32.mrb[0].mxu0
      %v801 = vadd.f32 %v629, %v800
      %v802 = vpop.f32.mrb[0].mxu0
      %v803 = vpop.f32.mrb[0].mxu0
      %v804 = vadd.f32 %v629, %v803
      %v805 = vpop.f32.mrb[0].mxu0
      %806 = vmatprep.mubr.bf16.mxu0 %v539
      %807 = vmatmul.mubr.bf16.gmra.mrb[0].mxu0 %v538
      %v808 = vpop.f32.mrb[0].mxu0
      %v809 = vadd.f32 %v629, %v808
      %v810 = vpop.f32.mrb[0].mxu0
      %v811 = vpop.f32.mrb[0].mxu0
      %v812 = vadd.f32 %v629, %v811
      %v813 = vpop.f32.mrb[0].mxu0
      %814 = vmatprep.mubr.bf16.mxu0 %v541
      %815 = vmatmul.mubr.bf16.gmra.mrb[0].mxu0 %v540
      %v816 = vpop.f32.mrb[0].mxu0
      %v817 = vadd.f32 %v629, %v816
      %v818 = vpop.f32.mrb[0].mxu0
      %v819 = vpop.f32.mrb[0].mxu0
      %v820 = vadd.f32 %v629, %v819
      %v821 = vpop.f32.mrb[0].mxu0
      %822 = vdwg.mxu0
      %v823 = vmax.f32 %v761, 0.0
      %v824 = vmax.f32 %v764, 0.0
      %v825 = vmax.f32 %v769, 0.0
      %v826 = vmax.f32 %v772, 0.0
      %v827 = vmax.f32 %v777, 0.0
      %v828 = vmax.f32 %v780, 0.0
      %v829 = vmax.f32 %v785, 0.0
      %v830 = vmax.f32 %v788, 0.0
      %v831 = vmax.f32 %v793, 0.0
      %v832 = vmax.f32 %v796, 0.0
      %v833 = vmax.f32 %v801, 0.0
      %v834 = vmax.f32 %v804, 0.0
      %v835 = vmax.f32 %v809, 0.0
      %v836 = vmax.f32 %v812, 0.0
      %v837 = vmax.f32 %v817, 0.0
      %v838 = vmax.f32 %v820, 0.0
      %v839 = vpack.c.bf16 %v824, %v823
      %v840 = vpack.c.bf16 %v826, %v825
      %v841 = vpack.c.bf16 %v828, %v827
      %v842 = vpack.c.bf16 %v830, %v829
      %v843 = vpack.c.bf16 %v832, %v831
      %v844 = vpack.c.bf16 %v834, %v833
      %v845 = vpack.c.bf16 %v836, %v835
      %v846 = vpack.c.bf16 %v838, %v837
      %v847 = vlaneseq
      %v848 = vshrl.u32 %v847, 7
      %v849 = vsub.s32 0, %v848
      %v850 = vrot.slane %v623, %v849
      %v867 = vunpack.c.l.b16 %v574
      %v868 = vunpack.c.l.b16 %v575
      %v869 = vunpack.c.l.b16 %v576
      %v870 = vunpack.c.l.b16 %v577
      %v871 = vunpack.c.l.b16 %v578
      %v872 = vunpack.c.l.b16 %v579
      %v873 = vunpack.c.l.b16 %v580
      %v874 = vunpack.c.l.b16 %v581
      %v875 = vunpack.c.l.b16 %v582
      %v876 = vunpack.c.l.b16 %v583
      %v877 = vunpack.c.l.b16 %v584
      %v878 = vunpack.c.l.b16 %v585
      %v879 = vunpack.c.l.b16 %v586
      %v880 = vunpack.c.l.b16 %v587
      %v881 = vunpack.c.l.b16 %v588
      %v882 = vunpack.c.l.b16 %v589
      %v883 = vpack.c.b16 %v868, %v867
      %v884 = vpack.c.b16 %v870, %v869
      %v885 = vpack.c.b16 %v872, %v871
      %v886 = vpack.c.b16 %v874, %v873
      %v887 = vpack.c.b16 %v876, %v875
      %v888 = vpack.c.b16 %v878, %v877
      %v889 = vpack.c.b16 %v880, %v879
      %v890 = vpack.c.b16 %v882, %v881
      %899 = vmatprep.subr.bf16.mxu0 0
      %900 = vmatpush1.bf16.msra.mxu0 %v883
      %901 = vmatprep.subr.bf16.mxu0 0
      %902 = vmatpush1.bf16.msra.mxu0 %v884
      %903 = vmatprep.subr.bf16.mxu0 0
      %904 = vmatpush1.bf16.msra.mxu0 %v885
      %905 = vmatprep.subr.bf16.mxu0 0
      %906 = vmatpush1.bf16.msra.mxu0 %v886
      %907 = vmatprep.subr.bf16.mxu0 0
      %908 = vmatpush1.bf16.msra.mxu0 %v887
      %909 = vmatprep.subr.bf16.mxu0 0
      %910 = vmatpush1.bf16.msra.mxu0 %v888
      %911 = vmatprep.subr.bf16.mxu0 0
      %912 = vmatpush1.bf16.msra.mxu0 %v889
      %913 = vmatprep.subr.bf16.mxu0 0
      %914 = vmatpush1.bf16.msra.mxu0 %v890
      %915 = vmatprep.subr.bf16.mxu0 0
      %916 = vmatpush1.bf16.msra.mxu0 0
      %917 = vmatprep.subr.bf16.mxu0 0
      %918 = vmatpush1.bf16.msra.mxu0 0
      %919 = vmatprep.subr.bf16.mxu0 0
      %920 = vmatpush1.bf16.msra.mxu0 0
      %921 = vmatprep.subr.bf16.mxu0 0
      %922 = vmatpush1.bf16.msra.mxu0 0
      %923 = vmatprep.subr.bf16.mxu0 0
      %924 = vmatpush1.bf16.msra.mxu0 0
      %925 = vmatprep.subr.bf16.mxu0 0
      %926 = vmatpush1.bf16.msra.mxu0 0
      %927 = vmatprep.subr.bf16.mxu0 0
      %928 = vmatpush1.bf16.msra.mxu0 0
      %929 = vmatprep.subr.bf16.mxu0 0
      %930 = vmatpush1.bf16.msra.mxu0 0
      %931 = vmatprep.mubr.bf16.mxu0 0
      %932 = vmatmul.mubr.bf16.gmra.mrb[0].mxu0 %v839
      %v933 = vpop.f32.mrb[0].mxu0
      %v934 = vadd.f32 %v850, %v933
      %v935 = vpop.f32.mrb[0].mxu0
      %v936 = vpop.f32.mrb[0].mxu0
      %v937 = vadd.f32 %v850, %v936
      %v938 = vpop.f32.mrb[0].mxu0
      %939 = vmatprep.mubr.bf16.mxu0 0
      %940 = vmatmul.mubr.bf16.gmra.mrb[0].mxu0 %v840
      %v941 = vpop.f32.mrb[0].mxu0
      %v942 = vadd.f32 %v850, %v941
      %v943 = vpop.f32.mrb[0].mxu0
      %v944 = vpop.f32.mrb[0].mxu0
      %v945 = vadd.f32 %v850, %v944
      %v946 = vpop.f32.mrb[0].mxu0
      %947 = vmatprep.mubr.bf16.mxu0 0
      %948 = vmatmul.mubr.bf16.gmra.mrb[0].mxu0 %v841
      %v949 = vpop.f32.mrb[0].mxu0
      %v950 = vadd.f32 %v850, %v949
      %v951 = vpop.f32.mrb[0].mxu0
      %v952 = vpop.f32.mrb[0].mxu0
      %v953 = vadd.f32 %v850, %v952
      %v954 = vpop.f32.mrb[0].mxu0
      %955 = vmatprep.mubr.bf16.mxu0 0
      %956 = vmatmul.mubr.bf16.gmra.mrb[0].mxu0 %v842
      %v957 = vpop.f32.mrb[0].mxu0
      %v958 = vadd.f32 %v850, %v957
      %v959 = vpop.f32.mrb[0].mxu0
      %v960 = vpop.f32.mrb[0].mxu0
      %v961 = vadd.f32 %v850, %v960
      %v962 = vpop.f32.mrb[0].mxu0
      %963 = vmatprep.mubr.bf16.mxu0 0
      %964 = vmatmul.mubr.bf16.gmra.mrb[0].mxu0 %v843
      %v965 = vpop.f32.mrb[0].mxu0
      %v966 = vadd.f32 %v850, %v965
      %v967 = vpop.f32.mrb[0].mxu0
      %v968 = vpop.f32.mrb[0].mxu0
      %v969 = vadd.f32 %v850, %v968
      %v970 = vpop.f32.mrb[0].mxu0
      %971 = vmatprep.mubr.bf16.mxu0 0
      %972 = vmatmul.mubr.bf16.gmra.mrb[0].mxu0 %v844
      %v973 = vpop.f32.mrb[0].mxu0
      %v974 = vadd.f32 %v850, %v973
      %v975 = vpop.f32.mrb[0].mxu0
      %v976 = vpop.f32.mrb[0].mxu0
      %v977 = vadd.f32 %v850, %v976
      %v978 = vpop.f32.mrb[0].mxu0
      %979 = vmatprep.mubr.bf16.mxu0 0
      %980 = vmatmul.mubr.bf16.gmra.mrb[0].mxu0 %v845
      %v981 = vpop.f32.mrb[0].mxu0
      %v982 = vadd.f32 %v850, %v981
      %v983 = vpop.f32.mrb[0].mxu0
      %v984 = vpop.f32.mrb[0].mxu0
      %v985 = vadd.f32 %v850, %v984
      %v986 = vpop.f32.mrb[0].mxu0
      %987 = vmatprep.mubr.bf16.mxu0 0
      %988 = vmatmul.mubr.bf16.gmra.mrb[0].mxu0 %v846
      %v989 = vpop.f32.mrb[0].mxu0
      %v990 = vadd.f32 %v850, %v989
      %v991 = vpop.f32.mrb[0].mxu0
      %v992 = vpop.f32.mrb[0].mxu0
      %v993 = vadd.f32 %v850, %v992
      %v994 = vpop.f32.mrb[0].mxu0
      %995 = vdwg.mxu0
      %v996 = vlaneseq
      %v997 = vshrl.u32 %v996, 7
      %v998 = vsub.s32 0, %v997
      %v999 = vrot.slane %v624, %v998
      %v1016 = vunpack.c.l.b16 %v590
      %v1017 = vunpack.c.l.b16 %v591
      %v1018 = vunpack.c.l.b16 %v592
      %v1019 = vunpack.c.l.b16 %v593
      %v1020 = vunpack.c.l.b16 %v594
      %v1021 = vunpack.c.l.b16 %v595
      %v1022 = vunpack.c.l.b16 %v596
      %v1023 = vunpack.c.l.b16 %v597
      %v1024 = vunpack.c.l.b16 %v598
      %v1025 = vunpack.c.l.b16 %v599
      %v1026 = vunpack.c.l.b16 %v600
      %v1027 = vunpack.c.l.b16 %v601
      %v1028 = vunpack.c.l.b16 %v602
      %v1029 = vunpack.c.l.b16 %v603
      %v1030 = vunpack.c.l.b16 %v604
      %v1031 = vunpack.c.l.b16 %v605
      %v1032 = vpack.c.b16 %v1017, %v1016
      %v1033 = vpack.c.b16 %v1019, %v1018
      %v1034 = vpack.c.b16 %v1021, %v1020
      %v1035 = vpack.c.b16 %v1023, %v1022
      %v1036 = vpack.c.b16 %v1025, %v1024
      %v1037 = vpack.c.b16 %v1027, %v1026
      %v1038 = vpack.c.b16 %v1029, %v1028
      %v1039 = vpack.c.b16 %v1031, %v1030
      %1048 = vmatprep.subr.bf16.mxu0 0
      %1049 = vmatpush1.bf16.msra.mxu0 %v1032
      %1050 = vmatprep.subr.bf16.mxu0 0
      %1051 = vmatpush1.bf16.msra.mxu0 %v1033
      %1052 = vmatprep.subr.bf16.mxu0 0
      %1053 = vmatpush1.bf16.msra.mxu0 %v1034
      %1054 = vmatprep.subr.bf16.mxu0 0
      %1055 = vmatpush1.bf16.msra.mxu0 %v1035
      %1056 = vmatprep.subr.bf16.mxu0 0
      %1057 = vmatpush1.bf16.msra.mxu0 %v1036
      %1058 = vmatprep.subr.bf16.mxu0 0
      %1059 = vmatpush1.bf16.msra.mxu0 %v1037
      %1060 = vmatprep.subr.bf16.mxu0 0
      %1061 = vmatpush1.bf16.msra.mxu0 %v1038
      %1062 = vmatprep.subr.bf16.mxu0 0
      %1063 = vmatpush1.bf16.msra.mxu0 %v1039
      %1064 = vmatprep.subr.bf16.mxu0 0
      %1065 = vmatpush1.bf16.msra.mxu0 0
      %1066 = vmatprep.subr.bf16.mxu0 0
      %1067 = vmatpush1.bf16.msra.mxu0 0
      %1068 = vmatprep.subr.bf16.mxu0 0
      %1069 = vmatpush1.bf16.msra.mxu0 0
      %1070 = vmatprep.subr.bf16.mxu0 0
      %1071 = vmatpush1.bf16.msra.mxu0 0
      %1072 = vmatprep.subr.bf16.mxu0 0
      %1073 = vmatpush1.bf16.msra.mxu0 0
      %1074 = vmatprep.subr.bf16.mxu0 0
      %1075 = vmatpush1.bf16.msra.mxu0 0
      %1076 = vmatprep.subr.bf16.mxu0 0
      %1077 = vmatpush1.bf16.msra.mxu0 0
      %1078 = vmatprep.subr.bf16.mxu0 0
      %1079 = vmatpush1.bf16.msra.mxu0 0
      %1080 = vmatprep.mubr.bf16.mxu0 0
      %1081 = vmatmul.mubr.bf16.gmra.mrb[0].mxu0 %v527
      %v1082 = vpop.f32.mrb[0].mxu0
      %v1083 = vadd.f32 %v999, %v1082
      %v1084 = vpop.f32.mrb[0].mxu0
      %v1085 = vpop.f32.mrb[0].mxu0
      %v1086 = vadd.f32 %v999, %v1085
      %v1087 = vpop.f32.mrb[0].mxu0
      %1088 = vmatprep.mubr.bf16.mxu0 0
      %1089 = vmatmul.mubr.bf16.gmra.mrb[0].mxu0 %v529
      %v1090 = vpop.f32.mrb[0].mxu0
      %v1091 = vadd.f32 %v999, %v1090
      %v1092 = vpop.f32.mrb[0].mxu0
      %v1093 = vpop.f32.mrb[0].mxu0
      %v1094 = vadd.f32 %v999, %v1093
      %v1095 = vpop.f32.mrb[0].mxu0
      %1096 = vmatprep.mubr.bf16.mxu0 0
      %1097 = vmatmul.mubr.bf16.gmra.mrb[0].mxu0 %v531
      %v1098 = vpop.f32.mrb[0].mxu0
      %v1099 = vadd.f32 %v999, %v1098
      %v1100 = vpop.f32.mrb[0].mxu0
      %v1101 = vpop.f32.mrb[0].mxu0
      %v1102 = vadd.f32 %v999, %v1101
      %v1103 = vpop.f32.mrb[0].mxu0
      %1104 = vmatprep.mubr.bf16.mxu0 0
      %1105 = vmatmul.mubr.bf16.gmra.mrb[0].mxu0 %v533
      %v1106 = vpop.f32.mrb[0].mxu0
      %v1107 = vadd.f32 %v999, %v1106
      %v1108 = vpop.f32.mrb[0].mxu0
      %v1109 = vpop.f32.mrb[0].mxu0
      %v1110 = vadd.f32 %v999, %v1109
      %v1111 = vpop.f32.mrb[0].mxu0
      %1112 = vmatprep.mubr.bf16.mxu0 0
      %1113 = vmatmul.mubr.bf16.gmra.mrb[0].mxu0 %v535
      %v1114 = vpop.f32.mrb[0].mxu0
      %v1115 = vadd.f32 %v999, %v1114
      %v1116 = vpop.f32.mrb[0].mxu0
      %v1117 = vpop.f32.mrb[0].mxu0
      %v1118 = vadd.f32 %v999, %v1117
      %v1119 = vpop.f32.mrb[0].mxu0
      %1120 = vmatprep.mubr.bf16.mxu0 0
      %1121 = vmatmul.mubr.bf16.gmra.mrb[0].mxu0 %v537
      %v1122 = vpop.f32.mrb[0].mxu0
      %v1123 = vadd.f32 %v999, %v1122
      %v1124 = vpop.f32.mrb[0].mxu0
      %v1125 = vpop.f32.mrb[0].mxu0
      %v1126 = vadd.f32 %v999, %v1125
      %v1127 = vpop.f32.mrb[0].mxu0
      %1128 = vmatprep.mubr.bf16.mxu0 0
      %1129 = vmatmul.mubr.bf16.gmra.mrb[0].mxu0 %v539
      %v1130 = vpop.f32.mrb[0].mxu0
      %v1131 = vadd.f32 %v999, %v1130
      %v1132 = vpop.f32.mrb[0].mxu0
      %v1133 = vpop.f32.mrb[0].mxu0
      %v1134 = vadd.f32 %v999, %v1133
      %v1135 = vpop.f32.mrb[0].mxu0
      %1136 = vmatprep.mubr.bf16.mxu0 0
      %1137 = vmatmul.mubr.bf16.gmra.mrb[0].mxu0 %v541
      %v1138 = vpop.f32.mrb[0].mxu0
      %v1139 = vadd.f32 %v999, %v1138
      %v1140 = vpop.f32.mrb[0].mxu0
      %v1141 = vpop.f32.mrb[0].mxu0
      %v1142 = vadd.f32 %v999, %v1141
      %v1143 = vpop.f32.mrb[0].mxu0
      %1144 = vdwg.mxu0
      %v1145 = vmax.f32 %v1083, 0.0
      %v1146 = vmax.f32 %v1086, 0.0
      %v1147 = vmax.f32 %v1091, 0.0
      %v1148 = vmax.f32 %v1094, 0.0
      %v1149 = vmax.f32 %v1099, 0.0
      %v1150 = vmax.f32 %v1102, 0.0
      %v1151 = vmax.f32 %v1107, 0.0
      %v1152 = vmax.f32 %v1110, 0.0
      %v1153 = vmax.f32 %v1115, 0.0
      %v1154 = vmax.f32 %v1118, 0.0
      %v1155 = vmax.f32 %v1123, 0.0
      %v1156 = vmax.f32 %v1126, 0.0
      %v1157 = vmax.f32 %v1131, 0.0
      %v1158 = vmax.f32 %v1134, 0.0
      %v1159 = vmax.f32 %v1139, 0.0
      %v1160 = vmax.f32 %v1142, 0.0
      %v1161 = vpack.c.bf16 %v1146, %v1145
      %v1162 = vpack.c.bf16 %v1148, %v1147
      %v1163 = vpack.c.bf16 %v1150, %v1149
      %v1164 = vpack.c.bf16 %v1152, %v1151
      %v1165 = vpack.c.bf16 %v1154, %v1153
      %v1166 = vpack.c.bf16 %v1156, %v1155
      %v1167 = vpack.c.bf16 %v1158, %v1157
      %v1168 = vpack.c.bf16 %v1160, %v1159
      %v1169 = vlaneseq
      %v1170 = vshrl.u32 %v1169, 7
      %v1171 = vsub.s32 0, %v1170
      %v1172 = vrot.slane %v625, %v1171
      %v1189 = vunpack.c.l.b16 %v606
      %v1190 = vunpack.c.l.b16 %v607
      %v1191 = vunpack.c.l.b16 %v608
      %v1192 = vunpack.c.l.b16 %v609
      %v1193 = vunpack.c.l.b16 %v610
      %v1194 = vunpack.c.l.b16 %v611
      %v1195 = vunpack.c.l.b16 %v612
      %v1196 = vunpack.c.l.b16 %v613
      %v1197 = vunpack.c.l.b16 %v614
      %v1198 = vunpack.c.l.b16 %v615
      %v1199 = vunpack.c.l.b16 %v616
      %v1200 = vunpack.c.l.b16 %v617
      %v1201 = vunpack.c.l.b16 %v618
      %v1202 = vunpack.c.l.b16 %v619
      %v1203 = vunpack.c.l.b16 %v620
      %v1204 = vunpack.c.l.b16 %v621
      %v1205 = vpack.c.b16 %v1190, %v1189
      %v1206 = vpack.c.b16 %v1192, %v1191
      %v1207 = vpack.c.b16 %v1194, %v1193
      %v1208 = vpack.c.b16 %v1196, %v1195
      %v1209 = vpack.c.b16 %v1198, %v1197
      %v1210 = vpack.c.b16 %v1200, %v1199
      %v1211 = vpack.c.b16 %v1202, %v1201
      %v1212 = vpack.c.b16 %v1204, %v1203
      %1221 = vmatprep.subr.bf16.mxu0 0
      %1222 = vmatpush1.bf16.msra.mxu0 %v1205
      %1223 = vmatprep.subr.bf16.mxu0 0
      %1224 = vmatpush1.bf16.msra.mxu0 %v1206
      %1225 = vmatprep.subr.bf16.mxu0 0
      %1226 = vmatpush1.bf16.msra.mxu0 %v1207
      %1227 = vmatprep.subr.bf16.mxu0 0
      %1228 = vmatpush1.bf16.msra.mxu0 %v1208
      %1229 = vmatprep.subr.bf16.mxu0 0
      %1230 = vmatpush1.bf16.msra.mxu0 %v1209
      %1231 = vmatprep.subr.bf16.mxu0 0
      %1232 = vmatpush1.bf16.msra.mxu0 %v1210
      %1233 = vmatprep.subr.bf16.mxu0 0
      %1234 = vmatpush1.bf16.msra.mxu0 %v1211
      %1235 = vmatprep.subr.bf16.mxu0 0
      %1236 = vmatpush1.bf16.msra.mxu0 %v1212
      %1237 = vmatprep.subr.bf16.mxu0 0
      %1238 = vmatpush1.bf16.msra.mxu0 0
      %1239 = vmatprep.subr.bf16.mxu0 0
      %1240 = vmatpush1.bf16.msra.mxu0 0
      %1241 = vmatprep.subr.bf16.mxu0 0
      %1242 = vmatpush1.bf16.msra.mxu0 0
      %1243 = vmatprep.subr.bf16.mxu0 0
      %1244 = vmatpush1.bf16.msra.mxu0 0
      %1245 = vmatprep.subr.bf16.mxu0 0
      %1246 = vmatpush1.bf16.msra.mxu0 0
      %1247 = vmatprep.subr.bf16.mxu0 0
      %1248 = vmatpush1.bf16.msra.mxu0 0
      %1249 = vmatprep.subr.bf16.mxu0 0
      %1250 = vmatpush1.bf16.msra.mxu0 0
      %1251 = vmatprep.subr.bf16.mxu0 0
      %1252 = vmatpush1.bf16.msra.mxu0 0
      %1253 = vmatprep.mubr.bf16.mxu0 0
      %1254 = vmatmul.mubr.bf16.gmra.mrb[0].mxu0 %v1161
      %v1255 = vpop.f32.mrb[0].mxu0
      %v1256 = vadd.f32 %v1172, %v1255
      %v1257 = vpop.f32.mrb[0].mxu0
      %v1258 = vpop.f32.mrb[0].mxu0
      %v1259 = vadd.f32 %v1172, %v1258
      %v1260 = vpop.f32.mrb[0].mxu0
      %1261 = vmatprep.mubr.bf16.mxu0 0
      %1262 = vmatmul.mubr.bf16.gmra.mrb[0].mxu0 %v1162
      %v1263 = vpop.f32.mrb[0].mxu0
      %v1264 = vadd.f32 %v1172, %v1263
      %v1265 = vpop.f32.mrb[0].mxu0
      %v1266 = vpop.f32.mrb[0].mxu0
      %v1267 = vadd.f32 %v1172, %v1266
      %v1268 = vpop.f32.mrb[0].mxu0
      %1269 = vmatprep.mubr.bf16.mxu0 0
      %1270 = vmatmul.mubr.bf16.gmra.mrb[0].mxu0 %v1163
      %v1271 = vpop.f32.mrb[0].mxu0
      %v1272 = vadd.f32 %v1172, %v1271
      %v1273 = vpop.f32.mrb[0].mxu0
      %v1274 = vpop.f32.mrb[0].mxu0
      %v1275 = vadd.f32 %v1172, %v1274
      %v1276 = vpop.f32.mrb[0].mxu0
      %1277 = vmatprep.mubr.bf16.mxu0 0
      %1278 = vmatmul.mubr.bf16.gmra.mrb[0].mxu0 %v1164
      %v1279 = vpop.f32.mrb[0].mxu0
      %v1280 = vadd.f32 %v1172, %v1279
      %v1281 = vpop.f32.mrb[0].mxu0
      %v1282 = vpop.f32.mrb[0].mxu0
      %v1283 = vadd.f32 %v1172, %v1282
      %v1284 = vpop.f32.mrb[0].mxu0
      %1285 = vmatprep.mubr.bf16.mxu0 0
      %1286 = vmatmul.mubr.bf16.gmra.mrb[0].mxu0 %v1165
      %v1287 = vpop.f32.mrb[0].mxu0
      %v1288 = vadd.f32 %v1172, %v1287
      %v1289 = vpop.f32.mrb[0].mxu0
      %v1290 = vpop.f32.mrb[0].mxu0
      %v1291 = vadd.f32 %v1172, %v1290
      %v1292 = vpop.f32.mrb[0].mxu0
      %1293 = vmatprep.mubr.bf16.mxu0 0
      %1294 = vmatmul.mubr.bf16.gmra.mrb[0].mxu0 %v1166
      %v1295 = vpop.f32.mrb[0].mxu0
      %v1296 = vadd.f32 %v1172, %v1295
      %v1297 = vpop.f32.mrb[0].mxu0
      %v1298 = vpop.f32.mrb[0].mxu0
      %v1299 = vadd.f32 %v1172, %v1298
      %v1300 = vpop.f32.mrb[0].mxu0
      %1301 = vmatprep.mubr.bf16.mxu0 0
      %1302 = vmatmul.mubr.bf16.gmra.mrb[0].mxu0 %v1167
      %v1303 = vpop.f32.mrb[0].mxu0
      %v1304 = vadd.f32 %v1172, %v1303
      %v1305 = vpop.f32.mrb[0].mxu0
      %v1306 = vpop.f32.mrb[0].mxu0
      %v1307 = vadd.f32 %v1172, %v1306
      %v1308 = vpop.f32.mrb[0].mxu0
      %1309 = vmatprep.mubr.bf16.mxu0 0
      %1310 = vmatmul.mubr.bf16.gmra.mrb[0].mxu0 %v1168
      %v1311 = vpop.f32.mrb[0].mxu0
      %v1312 = vadd.f32 %v1172, %v1311
      %v1313 = vpop.f32.mrb[0].mxu0
      %v1314 = vpop.f32.mrb[0].mxu0
      %v1315 = vadd.f32 %v1172, %v1314
      %v1316 = vpop.f32.mrb[0].mxu0
      %1317 = vdwg.mxu0
      %v1318 = vmax.f32 %v934, 0.0
      %v1319 = vmax.f32 %v937, 0.0
      %v1320 = vmax.f32 %v942, 0.0
      %v1321 = vmax.f32 %v945, 0.0
      %v1322 = vmax.f32 %v950, 0.0
      %v1323 = vmax.f32 %v953, 0.0
      %v1324 = vmax.f32 %v958, 0.0
      %v1325 = vmax.f32 %v961, 0.0
      %v1326 = vmax.f32 %v966, 0.0
      %v1327 = vmax.f32 %v969, 0.0
      %v1328 = vmax.f32 %v974, 0.0
      %v1329 = vmax.f32 %v977, 0.0
      %v1330 = vmax.f32 %v982, 0.0
      %v1331 = vmax.f32 %v985, 0.0
      %v1332 = vmax.f32 %v990, 0.0
      %v1333 = vmax.f32 %v993, 0.0
      %v1334 = vadd.f32 %v285, %v1318
      %v1335 = vadd.f32 %v287, %v1319
      %v1336 = vadd.f32 %v289, %v1320
      %v1337 = vadd.f32 %v291, %v1321
      %v1338 = vadd.f32 %v293, %v1322
      %v1339 = vadd.f32 %v295, %v1323
      %v1340 = vadd.f32 %v297, %v1324
      %v1341 = vadd.f32 %v299, %v1325
      %v1342 = vadd.f32 %v301, %v1326
      %v1343 = vadd.f32 %v303, %v1327
      %v1344 = vadd.f32 %v305, %v1328
      %v1345 = vadd.f32 %v307, %v1329
      %v1346 = vadd.f32 %v309, %v1330
      %v1347 = vadd.f32 %v311, %v1331
      %v1348 = vadd.f32 %v313, %v1332
      %v1349 = vadd.f32 %v315, %v1333
      %1350 = vst [vmem:[%s4] sm:$0xff] %v1334
      %1351 = vst [vmem:[%s4 + $0x10] sm:$0xff] %v1335
      %1352 = vst [vmem:[%s4 + $0x20] sm:$0xff] %v1336
      %1353 = vst [vmem:[%s4 + $0x30] sm:$0xff] %v1337
      %1354 = vst [vmem:[%s4 + $0x40] sm:$0xff] %v1338
      %1355 = vst [vmem:[%s4 + $0x50] sm:$0xff] %v1339
      %1356 = vst [vmem:[%s4 + $0x60] sm:$0xff] %v1340
      %1357 = vst [vmem:[%s4 + $0x70] sm:$0xff] %v1341
      %1358 = vst [vmem:[%s4 + $0x80] sm:$0xff] %v1342
      %1359 = vst [vmem:[%s4 + $0x90] sm:$0xff] %v1343
      %1360 = vst [vmem:[%s4 + $0xa0] sm:$0xff] %v1344
      %1361 = vst [vmem:[%s4 + $0xb0] sm:$0xff] %v1345
      %1362 = vst [vmem:[%s4 + $0xc0] sm:$0xff] %v1346
      %1363 = vst [vmem:[%s4 + $0xd0] sm:$0xff] %v1347
      %1364 = vst [vmem:[%s4 + $0xe0] sm:$0xff] %v1348
      %1365 = vst [vmem:[%s4 + $0xf0] sm:$0xff] %v1349
      %v1366 = vmax.f32 %v1256, 0.0
      %v1367 = vmax.f32 %v1259, 0.0
      %v1368 = vmax.f32 %v1264, 0.0
      %v1369 = vmax.f32 %v1267, 0.0
      %v1370 = vmax.f32 %v1272, 0.0
      %v1371 = vmax.f32 %v1275, 0.0
      %v1372 = vmax.f32 %v1280, 0.0
      %v1373 = vmax.f32 %v1283, 0.0
      %v1374 = vmax.f32 %v1288, 0.0
      %v1375 = vmax.f32 %v1291, 0.0
      %v1376 = vmax.f32 %v1296, 0.0
      %v1377 = vmax.f32 %v1299, 0.0
      %v1378 = vmax.f32 %v1304, 0.0
      %v1379 = vmax.f32 %v1307, 0.0
      %v1380 = vmax.f32 %v1312, 0.0
      %v1381 = vmax.f32 %v1315, 0.0
      %v1382 = vadd.f32 %v286, %v1366
      %v1383 = vadd.f32 %v288, %v1367
      %v1384 = vadd.f32 %v290, %v1368
      %v1385 = vadd.f32 %v292, %v1369
      %v1386 = vadd.f32 %v294, %v1370
      %v1387 = vadd.f32 %v296, %v1371
      %v1388 = vadd.f32 %v298, %v1372
      %v1389 = vadd.f32 %v300, %v1373
      %v1390 = vadd.f32 %v302, %v1374
      %v1391 = vadd.f32 %v304, %v1375
      %v1392 = vadd.f32 %v306, %v1376
      %v1393 = vadd.f32 %v308, %v1377
      %v1394 = vadd.f32 %v310, %v1378
      %v1395 = vadd.f32 %v312, %v1379
      %v1396 = vadd.f32 %v314, %v1380
      %v1397 = vadd.f32 %v316, %v1381
      %1398 = vst [vmem:[%s4 + $0x8] sm:$0xff] %v1382
      %1399 = vst [vmem:[%s4 + $0x18] sm:$0xff] %v1383
      %1400 = vst [vmem:[%s4 + $0x28] sm:$0xff] %v1384
      %1401 = vst [vmem:[%s4 + $0x38] sm:$0xff] %v1385
      %1402 = vst [vmem:[%s4 + $0x48] sm:$0xff] %v1386
      %1403 = vst [vmem:[%s4 + $0x58] sm:$0xff] %v1387
      %1404 = vst [vmem:[%s4 + $0x68] sm:$0xff] %v1388
      %1405 = vst [vmem:[%s4 + $0x78] sm:$0xff] %v1389
      %1406 = vst [vmem:[%s4 + $0x88] sm:$0xff] %v1390
      %1407 = vst [vmem:[%s4 + $0x98] sm:$0xff] %v1391
      %1408 = vst [vmem:[%s4 + $0xa8] sm:$0xff] %v1392
      %1409 = vst [vmem:[%s4 + $0xb8] sm:$0xff] %v1393
      %1410 = vst [vmem:[%s4 + $0xc8] sm:$0xff] %v1394
      %1411 = vst [vmem:[%s4 + $0xd8] sm:$0xff] %v1395
      %1412 = vst [vmem:[%s4 + $0xe8] sm:$0xff] %v1396
      %1413 = vst [vmem:[%s4 + $0xf8] sm:$0xff] %v1397
      // Predicated region
      $region41: #{gin_lspe_forward.1} parent=35 // pred_check
        %p1414 = pneg %p122
      $region42: #{gin_lspe_forward.1} parent=35 // pred_check_branch
        %1416 = sbr.rel (%p1414) target = $region44
      $region43: #{gin_lspe_forward.1} parent=35 // pred_region
        _
      $region44: #{gin_lspe_forward.1} parent=35 // pred_fallthru
        _
      // Predicated region
      $region45: #{gin_lspe_forward.1} parent=35 // pred_check
        %p1417 = pneg %p122
      $region46: #{gin_lspe_forward.1} parent=35 // pred_check_branch
        %1419 = sbr.rel (%p1417) target = $region48
      $region47: #{gin_lspe_forward.1} parent=35 // pred_region
        _
      $region48: #{gin_lspe_forward.1} parent=35 // pred_fallthru
        _
    $region36: #{gin_lspe_forward.1} parent=5 // pred_fallthru
      _
    %p1420 = scmp.le.s32.totalorder 2, %s10
    // Predicated region
    $region49: #{gin_lspe_forward.1} parent=5 // pred_check
      %p1421 = pneg %p1420
    $region50: #{gin_lspe_forward.1} parent=5 // pred_check_branch
      %1423 = sbr.rel (%p1421) target = $region52
    $region51: #{gin_lspe_forward.1} parent=5 // pred_region
      %s1424 = ssub.s32 %s10, 2
    $region52: #{gin_lspe_forward.1} parent=5 // pred_fallthru
      _
  $region6: #{gin_lspe_forward.1} parent=0 // loop_footer
    %s14 = sadd.s32 1, %s10
  $region7: #{gin_lspe_forward.1} parent=0 // loop_footer_branch
    %9 = sbr.rel target = $region3
  $region8: #{gin_lspe_forward.1} parent=0 // loop_exit
    _

</llo_original>
